<compile_context>
chip_gen: v7x
topology: tpu7x:2x2x1
jax: 0.10.0
libtpu: 0.0.40
codegen_flags: <defaults>
</compile_context>

<pallas_src>
import functools

import jax
import jax.numpy as jnp
from jax import lax
from jax.experimental import pallas as pl
from jax.experimental.pallas import tpu as pltpu

EPS = 1e-5  # PyTorch LayerNorm default


def mixer_layer_kernel(
    xw_ref,    # (S, TB*C_in)        f32   time-major block, lanes = (sample, channel)
    wt_ref,    # (S, S)              bf16  TimeMixing Linear(S,S).weight (PyTorch (out,in))
    bt_ref,    # (S, 1)              f32   TimeMixing bias as a column (broadcasts over lanes)
    g1t_ref,   # (S, TB*C_in)        f32   LayerNorm1 weight, tiled per sample along lanes
    b1t_ref,   # (S, TB*C_in)        f32   LayerNorm1 bias, tiled
    gblk_ref,  # (TB*C_in, TB*C_in)  f32   block-diag ones: per-sample lane-group sums
    wcat_ref,  # (C_in, ff+C_out)    bf16  [fc1 | projection] fused weight (pre-transposed)
    bcat_ref,  # (1, ff+C_out)       f32   [fc1 | projection] fused bias
    w2_ref,    # (ff, C_out)         bf16  fc2 weight (pre-transposed)
    b2_ref,    # (1, C_out)          f32   fc2 bias
    hblk_ref,  # (TB*S, TB*S)        f32   block-diag ones: per-sample row-group sums
    g2t_ref,   # (TB*S, C_out)       f32   LayerNorm2 weight, tiled per sample along rows
    b2t_ref,   # (TB*S, C_out)       f32   LayerNorm2 bias, tiled
    out_ref,   # (TB*S, C_out)       f32
    *, tb, s, c_in, c_out, ff,
):
    # ---------------- Time mixing ----------------
    # One dense MXU matmul over the whole batch tile: (S, S) @ (S, TB*C_in).
    xw = xw_ref[...]                                               # f32
    r = jnp.dot(wt_ref[...], xw.astype(jnp.bfloat16),
                preferred_element_type=jnp.float32)                # (S, TB*C_in)
    r = jnp.maximum(r + bt_ref[...], 0.0)                          # bias + ReLU (dropout = identity)
    u = xw + r                                                     # residual, f32

    # ------ LayerNorm((S, C_in)) per sample, vectorized over the batch tile ------
    # Per-sample sums of u and u^2: one f32 matmul against the block-diagonal ones
    # matrix (sums each sample's C_in-lane group) + one sublane reduction.
    inv_n1 = 1.0 / (s * c_in)
    gsum = jnp.dot(u, gblk_ref[...], preferred_element_type=jnp.float32)
    gsum2 = jnp.dot(u * u, gblk_ref[...], preferred_element_type=jnp.float32)
    mean1 = jnp.sum(gsum, axis=0, keepdims=True) * inv_n1          # (1, TB*C_in)
    ex2_1 = jnp.sum(gsum2, axis=0, keepdims=True) * inv_n1
    var1 = jnp.maximum(ex2_1 - mean1 * mean1, 0.0)
    rstd1 = lax.rsqrt(var1 + EPS)                                  # EUP, one vectorized op
    u_n = (u - mean1) * rstd1 * g1t_ref[...] + b1t_ref[...]        # (S, TB*C_in) f32

    # ------ Relayout (S, TB*C_in) -> (TB*S, C_in) for the channel matmuls ------
    # tb is a compile-time constant; lane slices -> row-major per-sample stack.
    u2 = jnp.concatenate(
        [u_n[:, b * c_in:(b + 1) * c_in] for b in range(tb)], axis=0)   # (TB*S, C_in)

    # ---------------- Feature mixing ----------------
    # fc1 and the residual projection share the LHS -> one fused matmul.
    z = jnp.dot(u2.astype(jnp.bfloat16), wcat_ref[...],
                preferred_element_type=jnp.float32) + bcat_ref[...]     # (TB*S, ff+C_out)
    h = jnp.maximum(z[:, :ff], 0.0)                                # ReLU(fc1(u))
    x_proj = z[:, ff:]                                             # projection(u)
    h2 = jnp.dot(h.astype(jnp.bfloat16), w2_ref[...],
                 preferred_element_type=jnp.float32) + b2_ref[...]
    v = x_proj + h2                                                # (TB*S, C_out) f32

    # ------ LayerNorm((S, C_out)) per sample, vectorized + single full store ------
    inv_n2 = 1.0 / (s * c_out)
    hsum = jnp.dot(hblk_ref[...], v, preferred_element_type=jnp.float32)
    hsum2 = jnp.dot(hblk_ref[...], v * v, preferred_element_type=jnp.float32)
    mean2 = jnp.sum(hsum, axis=1, keepdims=True) * inv_n2          # (TB*S, 1)
    ex2_2 = jnp.sum(hsum2, axis=1, keepdims=True) * inv_n2
    var2 = jnp.maximum(ex2_2 - mean2 * mean2, 0.0)
    rstd2 = lax.rsqrt(var2 + EPS)
    out_ref[...] = (v - mean2) * rstd2 * g2t_ref[...] + b2t_ref[...]


def mixer_layer(x, params, *, tb=None):
    """x: (N, S, C_in) float32.  Returns (N, S, C_out).  params use PyTorch layouts."""
    N, S, C_in = x.shape
    w_fc1 = params["w_fc1"]          # (ff, C_in)
    w_fc2 = params["w_fc2"]          # (C_out, ff)
    ff = w_fc1.shape[0]
    C_out = w_fc2.shape[0]
    w_proj = params.get("w_proj")    # (C_out, C_in) or None when C_in == C_out (Identity)
    b_proj = params.get("b_proj")
    if w_proj is None:
        w_proj = jnp.eye(C_out, C_in, dtype=jnp.float32)
        b_proj = jnp.zeros((C_out,), jnp.float32)

    # Batch tile: want TB*C_in lane-aligned (multiple of 128) and >= 2 grid steps
    # (so both TensorCores of a megacore part get work); else one full-batch step.
    if tb is None:
        cands = [d for d in range(1, N + 1)
                 if N % d == 0 and (d * C_in) % 128 == 0 and N // d >= 2]
        tb = max(cands) if cands else N
    assert N % tb == 0, "batch size must be divisible by the batch tile"
    assert (tb * C_in) % 128 == 0 or tb == N, (
        "choose tb so tb*C_in is a multiple of 128 (lane-aligned block)")
    grid = N // tb

    # ---- wrapper-side layout plumbing + weight packing (plain XLA, done once) ----
    xw = jnp.transpose(x, (1, 0, 2)).reshape(S, N * C_in)          # time-major, lanes = (b, c)
    wt = params["w_time"].astype(jnp.bfloat16)                     # (S, S)
    bt = params["b_time"].reshape(S, 1).astype(jnp.float32)
    g1t = jnp.tile(params["gamma1"].astype(jnp.float32), (1, tb))  # (S, TB*C_in)
    b1t = jnp.tile(params["beta1"].astype(jnp.float32), (1, tb))
    gblk = jnp.kron(jnp.eye(tb, dtype=jnp.float32),
                    jnp.ones((C_in, C_in), jnp.float32))           # (TB*C_in, TB*C_in)
    wcat = jnp.concatenate([w_fc1.T, w_proj.T], axis=1).astype(jnp.bfloat16)   # (C_in, ff+C_out)
    bcat = jnp.concatenate([params["b_fc1"], b_proj]).reshape(1, ff + C_out).astype(jnp.float32)
    w2 = w_fc2.T.astype(jnp.bfloat16)                              # (ff, C_out)
    b2 = params["b_fc2"].reshape(1, C_out).astype(jnp.float32)
    hblk = jnp.kron(jnp.eye(tb, dtype=jnp.float32),
                    jnp.ones((S, S), jnp.float32))                 # (TB*S, TB*S)
    g2t = jnp.tile(params["gamma2"].astype(jnp.float32), (tb, 1))  # (TB*S, C_out)
    b2t = jnp.tile(params["beta2"].astype(jnp.float32), (tb, 1))

    kernel = functools.partial(mixer_layer_kernel,
                               tb=tb, s=S, c_in=C_in, c_out=C_out, ff=ff)

    def full(shape):   # grid-invariant operand: whole array every step
        return pl.BlockSpec(shape, lambda b: (0,) * len(shape))

    out2 = pl.pallas_call(
        kernel,
        out_shape=jax.ShapeDtypeStruct((N * S, C_out), jnp.float32),
        grid=(grid,),
        in_specs=[
            pl.BlockSpec((S, tb * C_in), lambda b: (0, b)),        # xw, per-batch-tile slice
            full((S, S)),                    # w_time (bf16)
            full((S, 1)),                    # b_time
            full((S, tb * C_in)),            # gamma1 tiled
            full((S, tb * C_in)),            # beta1 tiled
            full((tb * C_in, tb * C_in)),    # lane-group segment-sum matrix
            full((C_in, ff + C_out)),        # [fc1 | proj] weight (bf16)
            full((1, ff + C_out)),           # [fc1 | proj] bias
            full((ff, C_out)),               # fc2 weight (bf16)
            full((1, C_out)),                # fc2 bias
            full((tb * S, tb * S)),          # row-group segment-sum matrix
            full((tb * S, C_out)),           # gamma2 tiled
            full((tb * S, C_out)),           # beta2 tiled
        ],
        out_specs=pl.BlockSpec((tb * S, C_out), lambda b: (b, 0)),
        compiler_params=pltpu.CompilerParams(dimension_semantics=("parallel",)),
    )(xw, wt, bt, g1t, b1t, gblk, wcat, bcat, w2, b2, hblk, g2t, b2t)

    return out2.reshape(N, S, C_out)


def mixer_layer_reference(x, params):
    """Pure-JAX f32 reference mirroring the PyTorch forward (eval mode)."""
    def layer_norm(v, g, b):
        m = jnp.mean(v, axis=(1, 2), keepdims=True)
        s = jnp.mean((v - m) ** 2, axis=(1, 2), keepdims=True)
        return (v - m) / jnp.sqrt(s + EPS) * g + b

    # Time mixing: permute -> Linear(S,S) -> relu -> permute back, residual, LN(S,C)
    x_res = jax.nn.relu(
        jnp.einsum("st,ntc->nsc", params["w_time"], x)
        + params["b_time"][None, :, None]
    )
    u = layer_norm(x + x_res, params["gamma1"], params["beta1"])
    # Feature mixing: projection + MLP over channels, residual, LN(S,C_out)
    if params.get("w_proj") is not None:
        x_proj = u @ params["w_proj"].T + params["b_proj"]
    else:
        x_proj = u
    h = jax.nn.relu(u @ params["w_fc1"].T + params["b_fc1"])
    h2 = h @ params["w_fc2"].T + params["b_fc2"]
    return layer_norm(x_proj + h2, params["gamma2"], params["beta2"])


def make_params(key, S, C_in, C_out, ff):
    """Parameters in PyTorch nn.Linear / nn.LayerNorm layouts."""
    ks = jax.random.split(key, 12)
    sc = 0.1
    n = lambda k, shape: sc * jax.random.normal(k, shape, jnp.float32)
    return {
        "w_time": n(ks[0], (S, S)),          # Linear(S, S).weight
        "b_time": n(ks[1], (S,)),
        "w_fc1": n(ks[2], (ff, C_in)),       # Linear(C_in, ff).weight
        "b_fc1": n(ks[3], (ff,)),
        "w_fc2": n(ks[4], (C_out, ff)),      # Linear(ff, C_out).weight
        "b_fc2": n(ks[5], (C_out,)),
        "w_proj": n(ks[6], (C_out, C_in)),   # Linear(C_in, C_out).weight
        "b_proj": n(ks[7], (C_out,)),
        "gamma1": 1.0 + n(ks[8], (S, C_in)),
        "beta1": n(ks[9], (S, C_in)),
        "gamma2": 1.0 + n(ks[10], (S, C_out)),
        "beta2": n(ks[11], (S, C_out)),
    }


if __name__ == "__main__":
    # Small shapes; TB=16 gives TB*C_in = 128 (lane-aligned) and a grid of 2.
    N, S, C_in, C_out, FF = 32, 8, 8, 16, 32

    key = jax.random.PRNGKey(0)
    kx, kp = jax.random.split(key)
    x = jax.random.normal(kx, (N, S, C_in), jnp.float32)
    params = make_params(kp, S, C_in, C_out, FF)

    out = mixer_layer(x, params, tb=16)
    out = jax.block_until_ready(out)

    ref = mixer_layer_reference(x, params)
    assert out.shape == (N, S, C_out)
    # bf16 matmul operands (f32 accumulation) => looser tolerance than pure f32.
    assert jnp.allclose(out, ref, atol=4e-2, rtol=4e-2), (
        f"mismatch vs reference, max |err| = {jnp.max(jnp.abs(out - ref))}")

    print("KERNEL_OK")
</pallas_src>

<mosaic_0001>
module attributes {stable_mosaic.version = 11 : i64} {
  func.func @mixer_layer_kernel(%arg0: i32, %arg1: memref<8x128xf32, #tpu.memory_space<vmem>>, %arg2: memref<8x8xbf16, #tpu.memory_space<vmem>>, %arg3: memref<8x1xf32, #tpu.memory_space<vmem>>, %arg4: memref<8x128xf32, #tpu.memory_space<vmem>>, %arg5: memref<8x128xf32, #tpu.memory_space<vmem>>, %arg6: memref<128x128xf32, #tpu.memory_space<vmem>>, %arg7: memref<8x48xbf16, #tpu.memory_space<vmem>>, %arg8: memref<1x48xf32, #tpu.memory_space<vmem>>, %arg9: memref<32x16xbf16, #tpu.memory_space<vmem>>, %arg10: memref<1x16xf32, #tpu.memory_space<vmem>>, %arg11: memref<128x128xf32, #tpu.memory_space<vmem>>, %arg12: memref<128x16xf32, #tpu.memory_space<vmem>>, %arg13: memref<128x16xf32, #tpu.memory_space<vmem>>, %arg14: memref<128x16xf32, #tpu.memory_space<vmem>>) attributes {dimension_semantics = [#tpu.dimension_semantics<parallel>], iteration_bounds = array<i64: 2>, scalar_prefetch = 0 : i64, scratch_operands = 0 : i64, tpu.core_type = #tpu.core_type<tc>, window_params = [{transform_indices = @transform_0, window_bounds = array<i64: 8, 128>}, {pipeline_mode = #tpu.pipeline_mode<synchronous>, transform_indices = @transform_1, window_bounds = array<i64: 8, 8>}, {pipeline_mode = #tpu.pipeline_mode<synchronous>, transform_indices = @transform_2, window_bounds = array<i64: 8, 1>}, {pipeline_mode = #tpu.pipeline_mode<synchronous>, transform_indices = @transform_3, window_bounds = array<i64: 8, 128>}, {pipeline_mode = #tpu.pipeline_mode<synchronous>, transform_indices = @transform_4, window_bounds = array<i64: 8, 128>}, {pipeline_mode = #tpu.pipeline_mode<synchronous>, transform_indices = @transform_5, window_bounds = array<i64: 128, 128>}, {pipeline_mode = #tpu.pipeline_mode<synchronous>, transform_indices = @transform_6, window_bounds = array<i64: 8, 48>}, {pipeline_mode = #tpu.pipeline_mode<synchronous>, transform_indices = @transform_7, window_bounds = array<i64: 1, 48>}, {pipeline_mode = #tpu.pipeline_mode<synchronous>, transform_indices = @transform_8, window_bounds = array<i64: 32, 16>}, {pipeline_mode = #tpu.pipeline_mode<synchronous>, transform_indices = @transform_9, window_bounds = array<i64: 1, 16>}, {pipeline_mode = #tpu.pipeline_mode<synchronous>, transform_indices = @transform_10, window_bounds = array<i64: 128, 128>}, {pipeline_mode = #tpu.pipeline_mode<synchronous>, transform_indices = @transform_11, window_bounds = array<i64: 128, 16>}, {pipeline_mode = #tpu.pipeline_mode<synchronous>, transform_indices = @transform_12, window_bounds = array<i64: 128, 16>}, {transform_indices = @transform_13, window_bounds = array<i64: 128, 16>}]} {
    %c0 = arith.constant 0 : index
    %c0_0 = arith.constant 0 : index
    %0 = vector.load %arg1[%c0, %c0_0] : memref<8x128xf32, #tpu.memory_space<vmem>>, vector<8x128xf32>
    %c0_1 = arith.constant 0 : index
    %c0_2 = arith.constant 0 : index
    %1 = vector.load %arg2[%c0_1, %c0_2] : memref<8x8xbf16, #tpu.memory_space<vmem>>, vector<8x8xbf16>
    %2 = arith.truncf %0 : vector<8x128xf32> to vector<8x128xbf16>
    %cst = arith.constant dense<0.000000e+00> : vector<8x128xf32>
    %3 = tpu.matmul %1, %2, %cst {dimension_numbers = #tpu.dot_dimension_numbers<[1], [0], [0], [1], [0, 0, 1, 1], [], []>} : vector<8x8xbf16>, vector<8x128xbf16>, vector<8x128xf32> -> vector<8x128xf32>
    %c0_3 = arith.constant 0 : index
    %c0_4 = arith.constant 0 : index
    %4 = vector.load %arg3[%c0_3, %c0_4] : memref<8x1xf32, #tpu.memory_space<vmem>>, vector<8x1xf32>
    %5 = vector.broadcast %4 : vector<8x1xf32> to vector<8x128xf32>
    %6 = arith.addf %3, %5 : vector<8x128xf32>
    %cst_5 = arith.constant 0.000000e+00 : f32
    %7 = vector.broadcast %cst_5 : f32 to vector<8x128xf32>
    %8 = arith.maximumf %6, %7 : vector<8x128xf32>
    %9 = arith.addf %0, %8 : vector<8x128xf32>
    %c0_6 = arith.constant 0 : index
    %c0_7 = arith.constant 0 : index
    %10 = vector.load %arg6[%c0_6, %c0_7] : memref<128x128xf32, #tpu.memory_space<vmem>>, vector<128x128xf32>
    %cst_8 = arith.constant dense<0.000000e+00> : vector<8x128xf32>
    %11 = tpu.matmul %9, %10, %cst_8 {dimension_numbers = #tpu.dot_dimension_numbers<[1], [0], [0], [1], [0, 0, 1, 1], [], []>} : vector<8x128xf32>, vector<128x128xf32>, vector<8x128xf32> -> vector<8x128xf32>
    %12 = arith.mulf %9, %9 : vector<8x128xf32>
    %c0_9 = arith.constant 0 : index
    %c0_10 = arith.constant 0 : index
    %13 = vector.load %arg6[%c0_9, %c0_10] : memref<128x128xf32, #tpu.memory_space<vmem>>, vector<128x128xf32>
    %cst_11 = arith.constant dense<0.000000e+00> : vector<8x128xf32>
    %14 = tpu.matmul %12, %13, %cst_11 {dimension_numbers = #tpu.dot_dimension_numbers<[1], [0], [0], [1], [0, 0, 1, 1], [], []>} : vector<8x128xf32>, vector<128x128xf32>, vector<8x128xf32> -> vector<8x128xf32>
    %cst_12 = arith.constant dense<0.000000e+00> : vector<128xf32>
    %15 = vector.multi_reduction <add>, %11, %cst_12 [0] : vector<8x128xf32> to vector<128xf32>
    %16 = vector.shape_cast %15 : vector<128xf32> to vector<1x128xf32>
    %cst_13 = arith.constant 1.562500e-02 : f32
    %17 = vector.broadcast %cst_13 : f32 to vector<1x128xf32>
    %18 = arith.mulf %16, %17 : vector<1x128xf32>
    %cst_14 = arith.constant dense<0.000000e+00> : vector<128xf32>
    %19 = vector.multi_reduction <add>, %14, %cst_14 [0] : vector<8x128xf32> to vector<128xf32>
    %20 = vector.shape_cast %19 : vector<128xf32> to vector<1x128xf32>
    %cst_15 = arith.constant 1.562500e-02 : f32
    %21 = vector.broadcast %cst_15 : f32 to vector<1x128xf32>
    %22 = arith.mulf %20, %21 : vector<1x128xf32>
    %23 = arith.mulf %18, %18 : vector<1x128xf32>
    %24 = arith.subf %22, %23 : vector<1x128xf32>
    %cst_16 = arith.constant 0.000000e+00 : f32
    %25 = vector.broadcast %cst_16 : f32 to vector<1x128xf32>
    %26 = arith.maximumf %24, %25 : vector<1x128xf32>
    %cst_17 = arith.constant 9.99999974E-6 : f32
    %27 = vector.broadcast %cst_17 : f32 to vector<1x128xf32>
    %28 = arith.addf %26, %27 : vector<1x128xf32>
    %29 = math.rsqrt %28 : vector<1x128xf32>
    %30 = vector.broadcast %18 : vector<1x128xf32> to vector<8x128xf32>
    %31 = arith.subf %9, %30 : vector<8x128xf32>
    %32 = vector.broadcast %29 : vector<1x128xf32> to vector<8x128xf32>
    %33 = arith.mulf %31, %32 : vector<8x128xf32>
    %c0_18 = arith.constant 0 : index
    %c0_19 = arith.constant 0 : index
    %34 = vector.load %arg4[%c0_18, %c0_19] : memref<8x128xf32, #tpu.memory_space<vmem>>, vector<8x128xf32>
    %35 = arith.mulf %33, %34 : vector<8x128xf32>
    %c0_20 = arith.constant 0 : index
    %c0_21 = arith.constant 0 : index
    %36 = vector.load %arg5[%c0_20, %c0_21] : memref<8x128xf32, #tpu.memory_space<vmem>>, vector<8x128xf32>
    %37 = arith.addf %35, %36 : vector<8x128xf32>
    %38 = vector.extract_strided_slice %37 {offsets = [0, 0], sizes = [8, 8], strides = [1, 1]} : vector<8x128xf32> to vector<8x8xf32>
    %39 = vector.extract_strided_slice %37 {offsets = [0, 8], sizes = [8, 8], strides = [1, 1]} : vector<8x128xf32> to vector<8x8xf32>
    %40 = vector.extract_strided_slice %37 {offsets = [0, 16], sizes = [8, 8], strides = [1, 1]} : vector<8x128xf32> to vector<8x8xf32>
    %41 = vector.extract_strided_slice %37 {offsets = [0, 24], sizes = [8, 8], strides = [1, 1]} : vector<8x128xf32> to vector<8x8xf32>
    %42 = vector.extract_strided_slice %37 {offsets = [0, 32], sizes = [8, 8], strides = [1, 1]} : vector<8x128xf32> to vector<8x8xf32>
    %43 = vector.extract_strided_slice %37 {offsets = [0, 40], sizes = [8, 8], strides = [1, 1]} : vector<8x128xf32> to vector<8x8xf32>
    %44 = vector.extract_strided_slice %37 {offsets = [0, 48], sizes = [8, 8], strides = [1, 1]} : vector<8x128xf32> to vector<8x8xf32>
    %45 = vector.extract_strided_slice %37 {offsets = [0, 56], sizes = [8, 8], strides = [1, 1]} : vector<8x128xf32> to vector<8x8xf32>
    %46 = vector.extract_strided_slice %37 {offsets = [0, 64], sizes = [8, 8], strides = [1, 1]} : vector<8x128xf32> to vector<8x8xf32>
    %47 = vector.extract_strided_slice %37 {offsets = [0, 72], sizes = [8, 8], strides = [1, 1]} : vector<8x128xf32> to vector<8x8xf32>
    %48 = vector.extract_strided_slice %37 {offsets = [0, 80], sizes = [8, 8], strides = [1, 1]} : vector<8x128xf32> to vector<8x8xf32>
    %49 = vector.extract_strided_slice %37 {offsets = [0, 88], sizes = [8, 8], strides = [1, 1]} : vector<8x128xf32> to vector<8x8xf32>
    %50 = vector.extract_strided_slice %37 {offsets = [0, 96], sizes = [8, 8], strides = [1, 1]} : vector<8x128xf32> to vector<8x8xf32>
    %51 = vector.extract_strided_slice %37 {offsets = [0, 104], sizes = [8, 8], strides = [1, 1]} : vector<8x128xf32> to vector<8x8xf32>
    %52 = vector.extract_strided_slice %37 {offsets = [0, 112], sizes = [8, 8], strides = [1, 1]} : vector<8x128xf32> to vector<8x8xf32>
    %53 = vector.extract_strided_slice %37 {offsets = [0, 120], sizes = [8, 8], strides = [1, 1]} : vector<8x128xf32> to vector<8x8xf32>
    %54 = tpu.concatenate %38, %39, %40, %41, %42, %43, %44, %45, %46, %47, %48, %49, %50, %51, %52, %53 in 0 : vector<8x8xf32>, vector<8x8xf32>, vector<8x8xf32>, vector<8x8xf32>, vector<8x8xf32>, vector<8x8xf32>, vector<8x8xf32>, vector<8x8xf32>, vector<8x8xf32>, vector<8x8xf32>, vector<8x8xf32>, vector<8x8xf32>, vector<8x8xf32>, vector<8x8xf32>, vector<8x8xf32>, vector<8x8xf32> -> vector<128x8xf32>
    %55 = arith.truncf %54 : vector<128x8xf32> to vector<128x8xbf16>
    %c0_22 = arith.constant 0 : index
    %c0_23 = arith.constant 0 : index
    %56 = vector.load %arg7[%c0_22, %c0_23] : memref<8x48xbf16, #tpu.memory_space<vmem>>, vector<8x48xbf16>
    %cst_24 = arith.constant dense<0.000000e+00> : vector<128x48xf32>
    %57 = tpu.matmul %55, %56, %cst_24 {dimension_numbers = #tpu.dot_dimension_numbers<[1], [0], [0], [1], [0, 0, 1, 1], [], []>} : vector<128x8xbf16>, vector<8x48xbf16>, vector<128x48xf32> -> vector<128x48xf32>
    %c0_25 = arith.constant 0 : index
    %c0_26 = arith.constant 0 : index
    %58 = vector.load %arg8[%c0_25, %c0_26] : memref<1x48xf32, #tpu.memory_space<vmem>>, vector<1x48xf32>
    %59 = vector.broadcast %58 : vector<1x48xf32> to vector<128x48xf32>
    %60 = arith.addf %57, %59 : vector<128x48xf32>
    %61 = vector.extract_strided_slice %60 {offsets = [0, 0], sizes = [128, 32], strides = [1, 1]} : vector<128x48xf32> to vector<128x32xf32>
    %cst_27 = arith.constant 0.000000e+00 : f32
    %62 = vector.broadcast %cst_27 : f32 to vector<128x32xf32>
    %63 = arith.maximumf %61, %62 : vector<128x32xf32>
    %64 = vector.extract_strided_slice %60 {offsets = [0, 32], sizes = [128, 16], strides = [1, 1]} : vector<128x48xf32> to vector<128x16xf32>
    %65 = arith.truncf %63 : vector<128x32xf32> to vector<128x32xbf16>
    %c0_28 = arith.constant 0 : index
    %c0_29 = arith.constant 0 : index
    %66 = vector.load %arg9[%c0_28, %c0_29] : memref<32x16xbf16, #tpu.memory_space<vmem>>, vector<32x16xbf16>
    %cst_30 = arith.constant dense<0.000000e+00> : vector<128x16xf32>
    %67 = tpu.matmul %65, %66, %cst_30 {dimension_numbers = #tpu.dot_dimension_numbers<[1], [0], [0], [1], [0, 0, 1, 1], [], []>} : vector<128x32xbf16>, vector<32x16xbf16>, vector<128x16xf32> -> vector<128x16xf32>
    %c0_31 = arith.constant 0 : index
    %c0_32 = arith.constant 0 : index
    %68 = vector.load %arg10[%c0_31, %c0_32] : memref<1x16xf32, #tpu.memory_space<vmem>>, vector<1x16xf32>
    %69 = vector.broadcast %68 : vector<1x16xf32> to vector<128x16xf32>
    %70 = arith.addf %67, %69 : vector<128x16xf32>
    %71 = arith.addf %64, %70 : vector<128x16xf32>
    %c0_33 = arith.constant 0 : index
    %c0_34 = arith.constant 0 : index
    %72 = vector.load %arg11[%c0_33, %c0_34] : memref<128x128xf32, #tpu.memory_space<vmem>>, vector<128x128xf32>
    %cst_35 = arith.constant dense<0.000000e+00> : vector<128x16xf32>
    %73 = tpu.matmul %72, %71, %cst_35 {dimension_numbers = #tpu.dot_dimension_numbers<[1], [0], [0], [1], [0, 0, 1, 1], [], []>} : vector<128x128xf32>, vector<128x16xf32>, vector<128x16xf32> -> vector<128x16xf32>
    %c0_36 = arith.constant 0 : index
    %c0_37 = arith.constant 0 : index
    %74 = vector.load %arg11[%c0_36, %c0_37] : memref<128x128xf32, #tpu.memory_space<vmem>>, vector<128x128xf32>
    %75 = arith.mulf %71, %71 : vector<128x16xf32>
    %cst_38 = arith.constant dense<0.000000e+00> : vector<128x16xf32>
    %76 = tpu.matmul %74, %75, %cst_38 {dimension_numbers = #tpu.dot_dimension_numbers<[1], [0], [0], [1], [0, 0, 1, 1], [], []>} : vector<128x128xf32>, vector<128x16xf32>, vector<128x16xf32> -> vector<128x16xf32>
    %cst_39 = arith.constant dense<0.000000e+00> : vector<128xf32>
    %77 = vector.multi_reduction <add>, %73, %cst_39 [1] : vector<128x16xf32> to vector<128xf32>
    %78 = vector.shape_cast %77 : vector<128xf32> to vector<128x1xf32>
    %cst_40 = arith.constant 7.812500e-03 : f32
    %79 = vector.broadcast %cst_40 : f32 to vector<128x1xf32>
    %80 = arith.mulf %78, %79 : vector<128x1xf32>
    %cst_41 = arith.constant dense<0.000000e+00> : vector<128xf32>
    %81 = vector.multi_reduction <add>, %76, %cst_41 [1] : vector<128x16xf32> to vector<128xf32>
    %82 = vector.shape_cast %81 : vector<128xf32> to vector<128x1xf32>
    %cst_42 = arith.constant 7.812500e-03 : f32
    %83 = vector.broadcast %cst_42 : f32 to vector<128x1xf32>
    %84 = arith.mulf %82, %83 : vector<128x1xf32>
    %85 = arith.mulf %80, %80 : vector<128x1xf32>
    %86 = arith.subf %84, %85 : vector<128x1xf32>
    %cst_43 = arith.constant 0.000000e+00 : f32
    %87 = vector.broadcast %cst_43 : f32 to vector<128x1xf32>
    %88 = arith.maximumf %86, %87 : vector<128x1xf32>
    %cst_44 = arith.constant 9.99999974E-6 : f32
    %89 = vector.broadcast %cst_44 : f32 to vector<128x1xf32>
    %90 = arith.addf %88, %89 : vector<128x1xf32>
    %91 = math.rsqrt %90 : vector<128x1xf32>
    %92 = vector.broadcast %80 : vector<128x1xf32> to vector<128x16xf32>
    %93 = arith.subf %71, %92 : vector<128x16xf32>
    %94 = vector.broadcast %91 : vector<128x1xf32> to vector<128x16xf32>
    %95 = arith.mulf %93, %94 : vector<128x16xf32>
    %c0_45 = arith.constant 0 : index
    %c0_46 = arith.constant 0 : index
    %96 = vector.load %arg12[%c0_45, %c0_46] : memref<128x16xf32, #tpu.memory_space<vmem>>, vector<128x16xf32>
    %97 = arith.mulf %95, %96 : vector<128x16xf32>
    %c0_47 = arith.constant 0 : index
    %c0_48 = arith.constant 0 : index
    %98 = vector.load %arg13[%c0_47, %c0_48] : memref<128x16xf32, #tpu.memory_space<vmem>>, vector<128x16xf32>
    %99 = arith.addf %97, %98 : vector<128x16xf32>
    %c0_49 = arith.constant 0 : index
    %c0_50 = arith.constant 0 : index
    %100 = vector.load %arg14[%c0_49, %c0_50] : memref<128x16xf32, #tpu.memory_space<vmem>>, vector<128x16xf32>
    tpu.vector_store %arg14[%c0_49, %c0_50], %99 {strides = array<i32>} : memref<128x16xf32, #tpu.memory_space<vmem>>, vector<128x16xf32>,
    return
  }
  func.func @transform_0(%arg0: i32) -> (i32, i32) {
    %c0_i32 = arith.constant 0 : i32
    %c0_i32_0 = arith.constant 0 : i32
    return %c0_i32, %arg0 : i32, i32
  }
  func.func @transform_1(%arg0: i32) -> (i32, i32) {
    %c0_i32 = arith.constant 0 : i32
    %c0_i32_0 = arith.constant 0 : i32
    %c0_i32_1 = arith.constant 0 : i32
    return %c0_i32, %c0_i32_0 : i32, i32
  }
  func.func @transform_2(%arg0: i32) -> (i32, i32) {
    %c0_i32 = arith.constant 0 : i32
    %c0_i32_0 = arith.constant 0 : i32
    %c0_i32_1 = arith.constant 0 : i32
    return %c0_i32, %c0_i32_0 : i32, i32
  }
  func.func @transform_3(%arg0: i32) -> (i32, i32) {
    %c0_i32 = arith.constant 0 : i32
    %c0_i32_0 = arith.constant 0 : i32
    %c0_i32_1 = arith.constant 0 : i32
    return %c0_i32, %c0_i32_0 : i32, i32
  }
  func.func @transform_4(%arg0: i32) -> (i32, i32) {
    %c0_i32 = arith.constant 0 : i32
    %c0_i32_0 = arith.constant 0 : i32
    %c0_i32_1 = arith.constant 0 : i32
    return %c0_i32, %c0_i32_0 : i32, i32
  }
  func.func @transform_5(%arg0: i32) -> (i32, i32) {
    %c0_i32 = arith.constant 0 : i32
    %c0_i32_0 = arith.constant 0 : i32
    %c0_i32_1 = arith.constant 0 : i32
    return %c0_i32, %c0_i32_0 : i32, i32
  }
  func.func @transform_6(%arg0: i32) -> (i32, i32) {
    %c0_i32 = arith.constant 0 : i32
    %c0_i32_0 = arith.constant 0 : i32
    %c0_i32_1 = arith.constant 0 : i32
    return %c0_i32, %c0_i32_0 : i32, i32
  }
  func.func @transform_7(%arg0: i32) -> (i32, i32) {
    %c0_i32 = arith.constant 0 : i32
    %c0_i32_0 = arith.constant 0 : i32
    %c0_i32_1 = arith.constant 0 : i32
    return %c0_i32, %c0_i32_0 : i32, i32
  }
  func.func @transform_8(%arg0: i32) -> (i32, i32) {
    %c0_i32 = arith.constant 0 : i32
    %c0_i32_0 = arith.constant 0 : i32
    %c0_i32_1 = arith.constant 0 : i32
    return %c0_i32, %c0_i32_0 : i32, i32
  }
  func.func @transform_9(%arg0: i32) -> (i32, i32) {
    %c0_i32 = arith.constant 0 : i32
    %c0_i32_0 = arith.constant 0 : i32
    %c0_i32_1 = arith.constant 0 : i32
    return %c0_i32, %c0_i32_0 : i32, i32
  }
  func.func @transform_10(%arg0: i32) -> (i32, i32) {
    %c0_i32 = arith.constant 0 : i32
    %c0_i32_0 = arith.constant 0 : i32
    %c0_i32_1 = arith.constant 0 : i32
    return %c0_i32, %c0_i32_0 : i32, i32
  }
  func.func @transform_11(%arg0: i32) -> (i32, i32) {
    %c0_i32 = arith.constant 0 : i32
    %c0_i32_0 = arith.constant 0 : i32
    %c0_i32_1 = arith.constant 0 : i32
    return %c0_i32, %c0_i32_0 : i32, i32
  }
  func.func @transform_12(%arg0: i32) -> (i32, i32) {
    %c0_i32 = arith.constant 0 : i32
    %c0_i32_0 = arith.constant 0 : i32
    %c0_i32_1 = arith.constant 0 : i32
    return %c0_i32, %c0_i32_0 : i32, i32
  }
  func.func @transform_13(%arg0: i32) -> (i32, i32) {
    %c0_i32 = arith.constant 0 : i32
    %c0_i32_0 = arith.constant 0 : i32
    return %arg0, %c0_i32 : i32, i32
  }
}

</mosaic_0001>

<llo_original>
// kernel: tpu_custom_call.1
$region0: #{tpu_custom_call.1}
  #allocation0 [shape = 'u32[]', space=smem, size = 0x4, offset = 0x4, fixed_abs, tag = 'smem constant byte address 0x4 - core index']
  #allocation1 [shape = 'u32[144,128]{1,0:T(1,128)}', space=vmem, size = 0x12000, scoped, tag = 'internal scratch']
  %s0 = inlined_call_operand.vmem [shape: f32[8,256], index: 0, kind: input, shape index: {}]
  %s1 = inlined_call_operand.hbm [shape: bf16[8,8], index: 1, kind: input, shape index: {}]
  %s2 = inlined_call_operand.vmem [shape: f32[8,1], index: 2, kind: input, shape index: {}]
  %s3 = inlined_call_operand.vmem [shape: f32[8,128], index: 3, kind: input, shape index: {}]
  %s4 = inlined_call_operand.vmem [shape: f32[8,128], index: 4, kind: input, shape index: {}]
  %s5 = inlined_call_operand.vmem [shape: f32[128,128], index: 5, kind: input, shape index: {}]
  %s6 = inlined_call_operand.vmem [shape: bf16[8,48], index: 6, kind: input, shape index: {}]
  %s7 = inlined_call_operand.vmem [shape: f32[1,48], index: 7, kind: input, shape index: {}]
  %s8 = inlined_call_operand.vmem [shape: bf16[32,16], index: 8, kind: input, shape index: {}]
  %s9 = inlined_call_operand.vmem [shape: f32[1,16], index: 9, kind: input, shape index: {}]
  %s10 = inlined_call_operand.vmem [shape: f32[128,128], index: 10, kind: input, shape index: {}]
  %s11 = inlined_call_operand.vmem [shape: f32[128,16], index: 11, kind: input, shape index: {}]
  %s12 = inlined_call_operand.vmem [shape: f32[128,16], index: 12, kind: input, shape index: {}]
  %s13 = inlined_call_operand.vmem [shape: f32[256,16], index: 13, kind: output, shape index: {}]
  %s14 = sld [smem:[#allocation0]]
  $region89: #{tpu_custom_call.1} parent=0
    _
  %s16 = ssub.s32 1, %s14
  %s17 = scalar_select 0, %s16, %s14
  $region1: #{tpu_custom_call.1} parent=0
    #allocation2 [shape = 'u8[2048]{0}', space=vmem, size = 0x800, scoped, tag = 'input window, operand 1, single buffered']
    #allocation3 [shape = 's32[2]{0}', space=sflag, size = 0x8, scoped, tag = 'scoped memory for tpu_custom_call.1']
    %18 = vsyncpa [#allocation3], 0
    loop: start=0, step=1, limit=4
    $region2: #{tpu_custom_call.1} parent=1 // loop_pre_header
      _
    $region3: #{tpu_custom_call.1} parent=1 // loop_header
      %s20 = sphi 0, %s24
      %p21 = scmp.ge.s32.totalorder %s20, 4
      %s30 = sphi 0, %s32
      %s33 = sphi 0, %s30
      %s34 = sphi 0, %s33
      %s50 = sphi 0, %s34
      %s54 = sphi 0, %s54
      %s56 = sphi 0, %s54
      %s57 = sphi 0, %s56
      %s71 = sphi 0, %s57
      %s75 = sphi 0, %s75
      %s77 = sphi 0, %s75
      %s78 = sphi 0, %s77
      %s92 = sphi 0, %s78
      %s96 = sphi 0, %s96
      %s98 = sphi 0, %s96
      %s99 = sphi 0, %s98
      %s113 = sphi 0, %s99
      %s117 = sphi 0, %s117
      %s119 = sphi 0, %s117
      %s120 = sphi 0, %s119
      %s134 = sphi 0, %s120
      %s138 = sphi 0, %s138
      %s140 = sphi 0, %s138
      %s141 = sphi 0, %s140
      %s155 = sphi 0, %s141
      %s159 = sphi 0, %s159
      %s161 = sphi 0, %s159
      %s162 = sphi 0, %s161
      %s176 = sphi 0, %s162
      %s180 = sphi 0, %s180
      %s182 = sphi 0, %s180
      %s183 = sphi 0, %s182
      %s197 = sphi 0, %s183
      %s201 = sphi 0, %s201
      %s203 = sphi 0, %s201
      %s204 = sphi 0, %s203
      %s218 = sphi 0, %s204
      %s222 = sphi 0, %s222
      %s224 = sphi 0, %s222
      %s225 = sphi 0, %s224
      %s239 = sphi 0, %s225
      %s243 = sphi 0, %s243
      %s245 = sphi 0, %s243
      %s246 = sphi 0, %s245
      %s260 = sphi 0, %s246
      %s264 = sphi 0, %s264
      %s266 = sphi 0, %s264
      %s267 = sphi 0, %s266
      %s281 = sphi 0, %s267
      %s285 = sphi 0, %s285
      %s287 = sphi 0, %s285
      %s288 = sphi 0, %s287
      %s302 = sphi 0, %s288
      %s308 = sphi 0, %s310
      %s311 = sphi 0, %s308
      %s312 = sphi 0, %s311
      %s328 = sphi 0, %s312
    $region4: #{tpu_custom_call.1} parent=1 // loop_header_branch
      %23 = sbr.rel (%p21) target = $region8
    $region5: #{tpu_custom_call.1} parent=1 // loop_body
      %s25 = ssub.s32 %s20, 1
      %s26 = ssub.s32 %s20, 2
      %s27 = sadd.s32 %s20, 1
      %s28 = ssub.s32 %s20, %s27
      %p29 = scmp.eq.s32.totalorder %s28, 0
      %s31 = sadd.s32 %s30, 1
      %s32 = scalar_select %p29, %s30, %s31
      %p35 = pneg %p29
      %p36 = scmp.eq.s32.totalorder %s20, 1
      %p37 = por %p35, %p36
      %p38 = scmp.ne.s32.totalorder %s30, %s33
      %p39 = scmp.eq.s32.totalorder %s20, 0
      %p40 = por %p38, %p39
      %p41 = scmp.ne.s32.totalorder %s30, %s33
      %p42 = scmp.eq.s32.totalorder %s25, 1
      %p43 = por %p41, %p42
      %p44 = scmp.ne.s32.totalorder %s33, %s34
      %p45 = scmp.eq.s32.totalorder %s25, 0
      %p46 = por %p44, %p45
      %p47 = scmp.ne.s32.totalorder %s33, %s34
      %p48 = scmp.eq.s32.totalorder %s26, 1
      %p49 = por %p47, %p48
      %p51 = scmp.ne.s32.totalorder %s34, %s50
      %p52 = scmp.eq.s32.totalorder %s26, 0
      %p53 = por %p51, %p52
      %s55 = sadd.s32 %s54, 1
      %p58 = scmp.eq.s32.totalorder %s20, 1
      %p59 = scmp.ne.s32.totalorder %s54, %s56
      %p60 = scmp.eq.s32.totalorder %s20, 0
      %p61 = por %p59, %p60
      %p62 = scmp.ne.s32.totalorder %s54, %s56
      %p63 = scmp.eq.s32.totalorder %s25, 1
      %p64 = por %p62, %p63
      %p65 = scmp.ne.s32.totalorder %s56, %s57
      %p66 = scmp.eq.s32.totalorder %s25, 0
      %p67 = por %p65, %p66
      %p68 = scmp.ne.s32.totalorder %s56, %s57
      %p69 = scmp.eq.s32.totalorder %s26, 1
      %p70 = por %p68, %p69
      %p72 = scmp.ne.s32.totalorder %s57, %s71
      %p73 = scmp.eq.s32.totalorder %s26, 0
      %p74 = por %p72, %p73
      %s76 = sadd.s32 %s75, 1
      %p79 = scmp.eq.s32.totalorder %s20, 1
      %p80 = scmp.ne.s32.totalorder %s75, %s77
      %p81 = scmp.eq.s32.totalorder %s20, 0
      %p82 = por %p80, %p81
      %p83 = scmp.ne.s32.totalorder %s75, %s77
      %p84 = scmp.eq.s32.totalorder %s25, 1
      %p85 = por %p83, %p84
      %p86 = scmp.ne.s32.totalorder %s77, %s78
      %p87 = scmp.eq.s32.totalorder %s25, 0
      %p88 = por %p86, %p87
      %p89 = scmp.ne.s32.totalorder %s77, %s78
      %p90 = scmp.eq.s32.totalorder %s26, 1
      %p91 = por %p89, %p90
      %p93 = scmp.ne.s32.totalorder %s78, %s92
      %p94 = scmp.eq.s32.totalorder %s26, 0
      %p95 = por %p93, %p94
      %s97 = sadd.s32 %s96, 1
      %p100 = scmp.eq.s32.totalorder %s20, 1
      %p101 = scmp.ne.s32.totalorder %s96, %s98
      %p102 = scmp.eq.s32.totalorder %s20, 0
      %p103 = por %p101, %p102
      %p104 = scmp.ne.s32.totalorder %s96, %s98
      %p105 = scmp.eq.s32.totalorder %s25, 1
      %p106 = por %p104, %p105
      %p107 = scmp.ne.s32.totalorder %s98, %s99
      %p108 = scmp.eq.s32.totalorder %s25, 0
      %p109 = por %p107, %p108
      %p110 = scmp.ne.s32.totalorder %s98, %s99
      %p111 = scmp.eq.s32.totalorder %s26, 1
      %p112 = por %p110, %p111
      %p114 = scmp.ne.s32.totalorder %s99, %s113
      %p115 = scmp.eq.s32.totalorder %s26, 0
      %p116 = por %p114, %p115
      %s118 = sadd.s32 %s117, 1
      %p121 = scmp.eq.s32.totalorder %s20, 1
      %p122 = scmp.ne.s32.totalorder %s117, %s119
      %p123 = scmp.eq.s32.totalorder %s20, 0
      %p124 = por %p122, %p123
      %p125 = scmp.ne.s32.totalorder %s117, %s119
      %p126 = scmp.eq.s32.totalorder %s25, 1
      %p127 = por %p125, %p126
      %p128 = scmp.ne.s32.totalorder %s119, %s120
      %p129 = scmp.eq.s32.totalorder %s25, 0
      %p130 = por %p128, %p129
      %p131 = scmp.ne.s32.totalorder %s119, %s120
      %p132 = scmp.eq.s32.totalorder %s26, 1
      %p133 = por %p131, %p132
      %p135 = scmp.ne.s32.totalorder %s120, %s134
      %p136 = scmp.eq.s32.totalorder %s26, 0
      %p137 = por %p135, %p136
      %s139 = sadd.s32 %s138, 1
      %p142 = scmp.eq.s32.totalorder %s20, 1
      %p143 = scmp.ne.s32.totalorder %s138, %s140
      %p144 = scmp.eq.s32.totalorder %s20, 0
      %p145 = por %p143, %p144
      %p146 = scmp.ne.s32.totalorder %s138, %s140
      %p147 = scmp.eq.s32.totalorder %s25, 1
      %p148 = por %p146, %p147
      %p149 = scmp.ne.s32.totalorder %s140, %s141
      %p150 = scmp.eq.s32.totalorder %s25, 0
      %p151 = por %p149, %p150
      %p152 = scmp.ne.s32.totalorder %s140, %s141
      %p153 = scmp.eq.s32.totalorder %s26, 1
      %p154 = por %p152, %p153
      %p156 = scmp.ne.s32.totalorder %s141, %s155
      %p157 = scmp.eq.s32.totalorder %s26, 0
      %p158 = por %p156, %p157
      %s160 = sadd.s32 %s159, 1
      %p163 = scmp.eq.s32.totalorder %s20, 1
      %p164 = scmp.ne.s32.totalorder %s159, %s161
      %p165 = scmp.eq.s32.totalorder %s20, 0
      %p166 = por %p164, %p165
      %p167 = scmp.ne.s32.totalorder %s159, %s161
      %p168 = scmp.eq.s32.totalorder %s25, 1
      %p169 = por %p167, %p168
      %p170 = scmp.ne.s32.totalorder %s161, %s162
      %p171 = scmp.eq.s32.totalorder %s25, 0
      %p172 = por %p170, %p171
      %p173 = scmp.ne.s32.totalorder %s161, %s162
      %p174 = scmp.eq.s32.totalorder %s26, 1
      %p175 = por %p173, %p174
      %p177 = scmp.ne.s32.totalorder %s162, %s176
      %p178 = scmp.eq.s32.totalorder %s26, 0
      %p179 = por %p177, %p178
      %s181 = sadd.s32 %s180, 1
      %p184 = scmp.eq.s32.totalorder %s20, 1
      %p185 = scmp.ne.s32.totalorder %s180, %s182
      %p186 = scmp.eq.s32.totalorder %s20, 0
      %p187 = por %p185, %p186
      %p188 = scmp.ne.s32.totalorder %s180, %s182
      %p189 = scmp.eq.s32.totalorder %s25, 1
      %p190 = por %p188, %p189
      %p191 = scmp.ne.s32.totalorder %s182, %s183
      %p192 = scmp.eq.s32.totalorder %s25, 0
      %p193 = por %p191, %p192
      %p194 = scmp.ne.s32.totalorder %s182, %s183
      %p195 = scmp.eq.s32.totalorder %s26, 1
      %p196 = por %p194, %p195
      %p198 = scmp.ne.s32.totalorder %s183, %s197
      %p199 = scmp.eq.s32.totalorder %s26, 0
      %p200 = por %p198, %p199
      %s202 = sadd.s32 %s201, 1
      %p205 = scmp.eq.s32.totalorder %s20, 1
      %p206 = scmp.ne.s32.totalorder %s201, %s203
      %p207 = scmp.eq.s32.totalorder %s20, 0
      %p208 = por %p206, %p207
      %p209 = scmp.ne.s32.totalorder %s201, %s203
      %p210 = scmp.eq.s32.totalorder %s25, 1
      %p211 = por %p209, %p210
      %p212 = scmp.ne.s32.totalorder %s203, %s204
      %p213 = scmp.eq.s32.totalorder %s25, 0
      %p214 = por %p212, %p213
      %p215 = scmp.ne.s32.totalorder %s203, %s204
      %p216 = scmp.eq.s32.totalorder %s26, 1
      %p217 = por %p215, %p216
      %p219 = scmp.ne.s32.totalorder %s204, %s218
      %p220 = scmp.eq.s32.totalorder %s26, 0
      %p221 = por %p219, %p220
      %s223 = sadd.s32 %s222, 1
      %p226 = scmp.eq.s32.totalorder %s20, 1
      %p227 = scmp.ne.s32.totalorder %s222, %s224
      %p228 = scmp.eq.s32.totalorder %s20, 0
      %p229 = por %p227, %p228
      %p230 = scmp.ne.s32.totalorder %s222, %s224
      %p231 = scmp.eq.s32.totalorder %s25, 1
      %p232 = por %p230, %p231
      %p233 = scmp.ne.s32.totalorder %s224, %s225
      %p234 = scmp.eq.s32.totalorder %s25, 0
      %p235 = por %p233, %p234
      %p236 = scmp.ne.s32.totalorder %s224, %s225
      %p237 = scmp.eq.s32.totalorder %s26, 1
      %p238 = por %p236, %p237
      %p240 = scmp.ne.s32.totalorder %s225, %s239
      %p241 = scmp.eq.s32.totalorder %s26, 0
      %p242 = por %p240, %p241
      %s244 = sadd.s32 %s243, 1
      %p247 = scmp.eq.s32.totalorder %s20, 1
      %p248 = scmp.ne.s32.totalorder %s243, %s245
      %p249 = scmp.eq.s32.totalorder %s20, 0
      %p250 = por %p248, %p249
      %p251 = scmp.ne.s32.totalorder %s243, %s245
      %p252 = scmp.eq.s32.totalorder %s25, 1
      %p253 = por %p251, %p252
      %p254 = scmp.ne.s32.totalorder %s245, %s246
      %p255 = scmp.eq.s32.totalorder %s25, 0
      %p256 = por %p254, %p255
      %p257 = scmp.ne.s32.totalorder %s245, %s246
      %p258 = scmp.eq.s32.totalorder %s26, 1
      %p259 = por %p257, %p258
      %p261 = scmp.ne.s32.totalorder %s246, %s260
      %p262 = scmp.eq.s32.totalorder %s26, 0
      %p263 = por %p261, %p262
      %s265 = sadd.s32 %s264, 1
      %p268 = scmp.eq.s32.totalorder %s20, 1
      %p269 = scmp.ne.s32.totalorder %s264, %s266
      %p270 = scmp.eq.s32.totalorder %s20, 0
      %p271 = por %p269, %p270
      %p272 = scmp.ne.s32.totalorder %s264, %s266
      %p273 = scmp.eq.s32.totalorder %s25, 1
      %p274 = por %p272, %p273
      %p275 = scmp.ne.s32.totalorder %s266, %s267
      %p276 = scmp.eq.s32.totalorder %s25, 0
      %p277 = por %p275, %p276
      %p278 = scmp.ne.s32.totalorder %s266, %s267
      %p279 = scmp.eq.s32.totalorder %s26, 1
      %p280 = por %p278, %p279
      %p282 = scmp.ne.s32.totalorder %s267, %s281
      %p283 = scmp.eq.s32.totalorder %s26, 0
      %p284 = por %p282, %p283
      %s286 = sadd.s32 %s285, 1
      %p289 = scmp.eq.s32.totalorder %s20, 1
      %p290 = scmp.ne.s32.totalorder %s285, %s287
      %p291 = scmp.eq.s32.totalorder %s20, 0
      %p292 = por %p290, %p291
      %p293 = scmp.ne.s32.totalorder %s285, %s287
      %p294 = scmp.eq.s32.totalorder %s25, 1
      %p295 = por %p293, %p294
      %p296 = scmp.ne.s32.totalorder %s287, %s288
      %p297 = scmp.eq.s32.totalorder %s25, 0
      %p298 = por %p296, %p297
      %p299 = scmp.ne.s32.totalorder %s287, %s288
      %p300 = scmp.eq.s32.totalorder %s26, 1
      %p301 = por %p299, %p300
      %p303 = scmp.ne.s32.totalorder %s288, %s302
      %p304 = scmp.eq.s32.totalorder %s26, 0
      %p305 = por %p303, %p304
      %s306 = ssub.s32 %s20, %s27
      %p307 = scmp.eq.s32.totalorder %s306, 0
      %s309 = sadd.s32 %s308, 1
      %s310 = scalar_select %p307, %s308, %s309
      %p313 = pneg %p307
      %p314 = scmp.eq.s32.totalorder %s20, 1
      %p315 = por %p313, %p314
      %p316 = scmp.ne.s32.totalorder %s308, %s311
      %p317 = scmp.eq.s32.totalorder %s20, 0
      %p318 = por %p316, %p317
      %p319 = scmp.ne.s32.totalorder %s308, %s311
      %p320 = scmp.eq.s32.totalorder %s25, 1
      %p321 = por %p319, %p320
      %p322 = scmp.ne.s32.totalorder %s311, %s312
      %p323 = scmp.eq.s32.totalorder %s25, 0
      %p324 = por %p322, %p323
      %p325 = scmp.ne.s32.totalorder %s311, %s312
      %p326 = scmp.eq.s32.totalorder %s26, 1
      %p327 = por %p325, %p326
      %p329 = scmp.ne.s32.totalorder %s312, %s328
      %p330 = scmp.eq.s32.totalorder %s26, 0
      %p331 = por %p329, %p330
      %p332 = scmp.le.s32.totalorder 1, %s20
      %p333 = scmp.lt.s32.totalorder %s20, 3
      %p334 = pnand %p332, %p333
      %p335 = pneg %p334
      // Predicated region
      $region9: #{tpu_custom_call.1} parent=5 // pred_check
        _
      $region10: #{tpu_custom_call.1} parent=5 // pred_check_branch
        %337 = sbr.rel (%p334) target = $region12
      $region11: #{tpu_custom_call.1} parent=5 // pred_region
        %s338 = ssub.s32 %s20, 1
        // Predicated region
        $region13: #{tpu_custom_call.1} parent=11 // pred_check
          %p339 = pneg %p67
        $region14: #{tpu_custom_call.1} parent=11 // pred_check_branch
          %341 = sbr.rel (%p339) target = $region16
        $region15: #{tpu_custom_call.1} parent=11 // pred_region
          %s343 = ssub.s32 64, 64
          %344 = vsyncadd [#allocation3], %s343
          %s346 = sshll.u32 [#allocation2], 4
          %s347 = int_to_ptr.vmem [resolvable:$true] %s346
          %349 = dma.hbm_to_vmem [thread:$0]  %s1, 64, %s347, [#allocation3]
        $region16: #{tpu_custom_call.1} parent=11 // pred_fallthru
          _
        // Predicated region
        $region17: #{tpu_custom_call.1} parent=11 // pred_check
          %p350 = pneg %p88
        $region18: #{tpu_custom_call.1} parent=11 // pred_check_branch
          %352 = sbr.rel (%p350) target = $region20
        $region19: #{tpu_custom_call.1} parent=11 // pred_region
          _
        $region20: #{tpu_custom_call.1} parent=11 // pred_fallthru
          _
        // Predicated region
        $region21: #{tpu_custom_call.1} parent=11 // pred_check
          %p353 = pneg %p109
        $region22: #{tpu_custom_call.1} parent=11 // pred_check_branch
          %355 = sbr.rel (%p353) target = $region24
        $region23: #{tpu_custom_call.1} parent=11 // pred_region
          _
        $region24: #{tpu_custom_call.1} parent=11 // pred_fallthru
          _
        // Predicated region
        $region25: #{tpu_custom_call.1} parent=11 // pred_check
          %p356 = pneg %p130
        $region26: #{tpu_custom_call.1} parent=11 // pred_check_branch
          %358 = sbr.rel (%p356) target = $region28
        $region27: #{tpu_custom_call.1} parent=11 // pred_region
          _
        $region28: #{tpu_custom_call.1} parent=11 // pred_fallthru
          _
        // Predicated region
        $region29: #{tpu_custom_call.1} parent=11 // pred_check
          %p359 = pneg %p151
        $region30: #{tpu_custom_call.1} parent=11 // pred_check_branch
          %361 = sbr.rel (%p359) target = $region32
        $region31: #{tpu_custom_call.1} parent=11 // pred_region
          _
        $region32: #{tpu_custom_call.1} parent=11 // pred_fallthru
          _
        // Predicated region
        $region33: #{tpu_custom_call.1} parent=11 // pred_check
          %p362 = pneg %p172
        $region34: #{tpu_custom_call.1} parent=11 // pred_check_branch
          %364 = sbr.rel (%p362) target = $region36
        $region35: #{tpu_custom_call.1} parent=11 // pred_region
          _
        $region36: #{tpu_custom_call.1} parent=11 // pred_fallthru
          _
        // Predicated region
        $region37: #{tpu_custom_call.1} parent=11 // pred_check
          %p365 = pneg %p193
        $region38: #{tpu_custom_call.1} parent=11 // pred_check_branch
          %367 = sbr.rel (%p365) target = $region40
        $region39: #{tpu_custom_call.1} parent=11 // pred_region
          _
        $region40: #{tpu_custom_call.1} parent=11 // pred_fallthru
          _
        // Predicated region
        $region41: #{tpu_custom_call.1} parent=11 // pred_check
          %p368 = pneg %p214
        $region42: #{tpu_custom_call.1} parent=11 // pred_check_branch
          %370 = sbr.rel (%p368) target = $region44
        $region43: #{tpu_custom_call.1} parent=11 // pred_region
          _
        $region44: #{tpu_custom_call.1} parent=11 // pred_fallthru
          _
        // Predicated region
        $region45: #{tpu_custom_call.1} parent=11 // pred_check
          %p371 = pneg %p235
        $region46: #{tpu_custom_call.1} parent=11 // pred_check_branch
          %373 = sbr.rel (%p371) target = $region48
        $region47: #{tpu_custom_call.1} parent=11 // pred_region
          _
        $region48: #{tpu_custom_call.1} parent=11 // pred_fallthru
          _
        // Predicated region
        $region49: #{tpu_custom_call.1} parent=11 // pred_check
          %p374 = pneg %p256
        $region50: #{tpu_custom_call.1} parent=11 // pred_check_branch
          %376 = sbr.rel (%p374) target = $region52
        $region51: #{tpu_custom_call.1} parent=11 // pred_region
          _
        $region52: #{tpu_custom_call.1} parent=11 // pred_fallthru
          _
        // Predicated region
        $region53: #{tpu_custom_call.1} parent=11 // pred_check
          %p377 = pneg %p277
        $region54: #{tpu_custom_call.1} parent=11 // pred_check_branch
          %379 = sbr.rel (%p377) target = $region56
        $region55: #{tpu_custom_call.1} parent=11 // pred_region
          _
        $region56: #{tpu_custom_call.1} parent=11 // pred_fallthru
          _
        // Predicated region
        $region57: #{tpu_custom_call.1} parent=11 // pred_check
          %p380 = pneg %p298
        $region58: #{tpu_custom_call.1} parent=11 // pred_check_branch
          %382 = sbr.rel (%p380) target = $region60
        $region59: #{tpu_custom_call.1} parent=11 // pred_region
          _
        $region60: #{tpu_custom_call.1} parent=11 // pred_fallthru
          _
      $region12: #{tpu_custom_call.1} parent=5 // pred_fallthru
        _
      %p383 = scmp.lt.s32.totalorder %s20, 2
      // Predicated region
      $region61: #{tpu_custom_call.1} parent=5 // pred_check
        %p384 = pneg %p383
      $region62: #{tpu_custom_call.1} parent=5 // pred_check_branch
        %386 = sbr.rel (%p384) target = $region64
      $region63: #{tpu_custom_call.1} parent=5 // pred_region
        // Predicated region
        $region65: #{tpu_custom_call.1} parent=63 // pred_check
          %p387 = pneg %p40
        $region66: #{tpu_custom_call.1} parent=63 // pred_check_branch
          %389 = sbr.rel (%p387) target = $region68
        $region67: #{tpu_custom_call.1} parent=63 // pred_region
          %p390 = scmp.lt.s32.totalorder %s20, 1
          %s391 = scalar_select %p390, %s20, 1
          %s392 = smul.addr %s391, 8
          %s393 = scalar_lea.vmem %s0, %s392
        $region68: #{tpu_custom_call.1} parent=63 // pred_fallthru
          _
      $region64: #{tpu_custom_call.1} parent=5 // pred_fallthru
        _
      %p394 = scmp.le.s32.totalorder 1, %s20
      %p395 = scmp.lt.s32.totalorder %s20, 3
      %p396 = pnand %p394, %p395
      %p397 = pneg %p396
      // Predicated region
      $region69: #{tpu_custom_call.1} parent=5 // pred_check
        _
      $region70: #{tpu_custom_call.1} parent=5 // pred_check_branch
        %399 = sbr.rel (%p396) target = $region72
      $region71: #{tpu_custom_call.1} parent=5 // pred_region
        %s400 = ssub.s32 %s20, 1
        // Predicated region
        $region73: #{tpu_custom_call.1} parent=71 // pred_check
          %p401 = pneg %p67
        $region74: #{tpu_custom_call.1} parent=71 // pred_check_branch
          %403 = sbr.rel (%p401) target = $region76
        $region75: #{tpu_custom_call.1} parent=71 // pred_region
          %404 = dma.done [#allocation3], 64
        $region76: #{tpu_custom_call.1} parent=71 // pred_fallthru
          _
        %p405 = scmp.lt.s32.totalorder %s25, 1
        %s406 = scalar_select %p405, %s25, 1
        %s407 = smul.addr %s406, 8
        %s408 = scalar_lea.vmem %s0, %s407
        %p409 = pneg %p46
        %p410 = pneg %p43
        %p411 = pneg %p67
        %p412 = pneg %p64
        %p413 = pneg %p88
        %p414 = pneg %p85
        %p415 = pneg %p109
        %p416 = pneg %p106
        %p417 = pneg %p130
        %p418 = pneg %p127
        %p419 = pneg %p151
        %p420 = pneg %p148
        %p421 = pneg %p172
        %p422 = pneg %p169
        %p423 = pneg %p193
        %p424 = pneg %p190
        %p425 = pneg %p214
        %p426 = pneg %p211
        %p427 = pneg %p235
        %p428 = pneg %p232
        %p429 = pneg %p256
        %p430 = pneg %p253
        %p431 = pneg %p277
        %p432 = pneg %p274
        %p433 = pneg %p298
        %p434 = pneg %p295
        %p435 = pneg %p324
        %p436 = pneg %p321
        %s437 = smul.u32 16, %s25
        %p438 = scmp.lt.s32.totalorder %s437, 31
        %s439 = scalar_select %p438, %s437, 31
        %s440 = smul.addr %s439, 8
        %s441 = scalar_lea.vmem %s13, %s440
        %p442 = scmp.lt.s32.totalorder %s25, 1
        %s443 = scalar_select %p442, %s25, 1
        %s444 = smul.addr %s443, 8
        %s445 = scalar_lea.vmem %s0, %s444
        %s446 = smul.u32 16, %s25
        %p447 = scmp.lt.s32.totalorder %s446, 31
        %s448 = scalar_select %p447, %s446, 31
        %s449 = smul.addr %s448, 8
        %s450 = scalar_lea.vmem %s13, %s449
        %s451 = smul.u32 16, %s25
        %v453 = vld [vmem:[%s445] sm:$0xff]
        %v454 = vld [vmem:[#allocation2] sm:$0xf]
        %v455 = vpack.c.bf16 %v453, %v453
        %v456 = vld [vmem:[%s2] sm:$0xff]
        %458 = vset.pattern.permute.xlu0 0
        %459 = vperm.xlu0 %458, %v456
        %v460 = vpop.permute.xlu0 %459
        %vm462 = vcmask 64512
        %v464 = vsel %vm462, %v454, 0
        %vm466 = vcmask 1043456
        %v468 = vsel %vm466, %v455, 0
        %470 = vmatprep.subr.bf16.mxu0 0
        %471 = vmatpush1.bf16.msra.mxu0 %v468
        %472 = vmatprep.subr.bf16.mxu0 0
        %473 = vmatpush1.bf16.msra.mxu0 0
        %474 = vmatprep.subr.bf16.mxu0 0
        %475 = vmatpush1.bf16.msra.mxu0 0
        %476 = vmatprep.subr.bf16.mxu0 0
        %477 = vmatpush1.bf16.msra.mxu0 0
        %478 = vmatprep.subr.bf16.mxu0 0
        %479 = vmatpush1.bf16.msra.mxu0 0
        %480 = vmatprep.subr.bf16.mxu0 0
        %481 = vmatpush1.bf16.msra.mxu0 0
        %482 = vmatprep.subr.bf16.mxu0 0
        %483 = vmatpush1.bf16.msra.mxu0 0
        %484 = vmatprep.subr.bf16.mxu0 0
        %485 = vmatpush1.bf16.msra.mxu0 0
        %486 = vmatprep.subr.bf16.mxu0 0
        %487 = vmatpush1.bf16.msra.mxu0 0
        %488 = vmatprep.subr.bf16.mxu0 0
        %489 = vmatpush1.bf16.msra.mxu0 0
        %490 = vmatprep.subr.bf16.mxu0 0
        %491 = vmatpush1.bf16.msra.mxu0 0
        %492 = vmatprep.subr.bf16.mxu0 0
        %493 = vmatpush1.bf16.msra.mxu0 0
        %494 = vmatprep.subr.bf16.mxu0 0
        %495 = vmatpush1.bf16.msra.mxu0 0
        %496 = vmatprep.subr.bf16.mxu0 0
        %497 = vmatpush1.bf16.msra.mxu0 0
        %498 = vmatprep.subr.bf16.mxu0 0
        %499 = vmatpush1.bf16.msra.mxu0 0
        %500 = vmatprep.subr.bf16.mxu0 0
        %501 = vmatpush1.bf16.msra.mxu0 0
        %502 = vmatprep.mubr.bf16.mxu0 0
        %503 = vmatmul.mubr.bf16.gmra.mrb[0].mxu0 %v464
        %v504 = vpop.f32.mrb[0].mxu0
        %v505 = vadd.f32 %v460, %v504
        %v506 = vpop.f32.mrb[0].mxu0
        %v507 = vpop.f32.mrb[0].mxu0
        %v508 = vpop.f32.mrb[0].mxu0
        %509 = vdwg.mxu0
        %v510 = vmax.f32 %v505, 0.0
        %v511 = vadd.f32 %v453, %v510
        %v512 = vld [vmem:[%s5] sm:$0xff]
        %v513 = vld [vmem:[%s5 + $0x8] sm:$0xff]
        %v514 = vld [vmem:[%s5 + $0x10] sm:$0xff]
        %v515 = vld [vmem:[%s5 + $0x18] sm:$0xff]
        %v516 = vld [vmem:[%s5 + $0x20] sm:$0xff]
        %v517 = vld [vmem:[%s5 + $0x28] sm:$0xff]
        %v518 = vld [vmem:[%s5 + $0x30] sm:$0xff]
        %v519 = vld [vmem:[%s5 + $0x38] sm:$0xff]
        %v520 = vld [vmem:[%s5 + $0x40] sm:$0xff]
        %v521 = vld [vmem:[%s5 + $0x48] sm:$0xff]
        %v522 = vld [vmem:[%s5 + $0x50] sm:$0xff]
        %v523 = vld [vmem:[%s5 + $0x58] sm:$0xff]
        %v524 = vld [vmem:[%s5 + $0x60] sm:$0xff]
        %v525 = vld [vmem:[%s5 + $0x68] sm:$0xff]
        %v526 = vld [vmem:[%s5 + $0x70] sm:$0xff]
        %v527 = vld [vmem:[%s5 + $0x78] sm:$0xff]
        %528 = vmatprep.subr.mxu0 0.0
        %529 = vmatpush1.msra.mxu0 %v512
        %530 = vmatprep.subr.mxu0 0.0
        %531 = vmatpush1.msra.mxu0 %v513
        %532 = vmatprep.subr.mxu0 0.0
        %533 = vmatpush1.msra.mxu0 %v514
        %534 = vmatprep.subr.mxu0 0.0
        %535 = vmatpush1.msra.mxu0 %v515
        %536 = vmatprep.subr.mxu0 0.0
        %537 = vmatpush1.msra.mxu0 %v516
        %538 = vmatprep.subr.mxu0 0.0
        %539 = vmatpush1.msra.mxu0 %v517
        %540 = vmatprep.subr.mxu0 0.0
        %541 = vmatpush1.msra.mxu0 %v518
        %542 = vmatprep.subr.mxu0 0.0
        %543 = vmatpush1.msra.mxu0 %v519
        %544 = vmatprep.subr.mxu0 0.0
        %545 = vmatpush1.msra.mxu0 %v520
        %546 = vmatprep.subr.mxu0 0.0
        %547 = vmatpush1.msra.mxu0 %v521
        %548 = vmatprep.subr.mxu0 0.0
        %549 = vmatpush1.msra.mxu0 %v522
        %550 = vmatprep.subr.mxu0 0.0
        %551 = vmatpush1.msra.mxu0 %v523
        %552 = vmatprep.subr.mxu0 0.0
        %553 = vmatpush1.msra.mxu0 %v524
        %554 = vmatprep.subr.mxu0 0.0
        %555 = vmatpush1.msra.mxu0 %v525
        %556 = vmatprep.subr.mxu0 0.0
        %557 = vmatpush1.msra.mxu0 %v526
        %558 = vmatprep.subr.mxu0 0.0
        %559 = vmatpush1.msra.mxu0 %v527
        %560 = vmatprep.subr.mxu0 0.0
        %561 = vmatpush1.msra.mxu0 0.0
        %562 = vmatprep.subr.mxu0 0.0
        %563 = vmatpush1.msra.mxu0 0.0
        %564 = vmatprep.subr.mxu0 0.0
        %565 = vmatpush1.msra.mxu0 0.0
        %566 = vmatprep.subr.mxu0 0.0
        %567 = vmatpush1.msra.mxu0 0.0
        %568 = vmatprep.subr.mxu0 0.0
        %569 = vmatpush1.msra.mxu0 0.0
        %570 = vmatprep.subr.mxu0 0.0
        %571 = vmatpush1.msra.mxu0 0.0
        %572 = vmatprep.subr.mxu0 0.0
        %573 = vmatpush1.msra.mxu0 0.0
        %574 = vmatprep.subr.mxu0 0.0
        %575 = vmatpush1.msra.mxu0 0.0
        %576 = vmatprep.subr.mxu0 0.0
        %577 = vmatpush1.msra.mxu0 0.0
        %578 = vmatprep.subr.mxu0 0.0
        %579 = vmatpush1.msra.mxu0 0.0
        %580 = vmatprep.subr.mxu0 0.0
        %581 = vmatpush1.msra.mxu0 0.0
        %582 = vmatprep.subr.mxu0 0.0
        %583 = vmatpush1.msra.mxu0 0.0
        %584 = vmatprep.subr.mxu0 0.0
        %585 = vmatpush1.msra.mxu0 0.0
        %586 = vmatprep.subr.mxu0 0.0
        %587 = vmatpush1.msra.mxu0 0.0
        %588 = vmatprep.subr.mxu0 0.0
        %589 = vmatpush1.msra.mxu0 0.0
        %590 = vmatprep.subr.mxu0 0.0
        %591 = vmatpush1.msra.mxu0 0.0
        %592 = vmatprep.mubr.f32.mxu0 0.0
        %593 = vmatmul.mubr.f32.gmra.mrb[0].mxu0 %v511
        %v594 = vpop.f32.mrb[0].mxu0
        %v595 = vadd.f32 0.0, %v594
        %v596 = vpop.f32.mrb[0].mxu0
        %597 = vdwg.mxu0
        %v598 = vmul.f32 %v511, %v511
        %599 = vmatprep.subr.mxu0 0.0
        %600 = vmatpush1.msra.mxu0 %v512
        %601 = vmatprep.subr.mxu0 0.0
        %602 = vmatpush1.msra.mxu0 %v513
        %603 = vmatprep.subr.mxu0 0.0
        %604 = vmatpush1.msra.mxu0 %v514
        %605 = vmatprep.subr.mxu0 0.0
        %606 = vmatpush1.msra.mxu0 %v515
        %607 = vmatprep.subr.mxu0 0.0
        %608 = vmatpush1.msra.mxu0 %v516
        %609 = vmatprep.subr.mxu0 0.0
        %610 = vmatpush1.msra.mxu0 %v517
        %611 = vmatprep.subr.mxu0 0.0
        %612 = vmatpush1.msra.mxu0 %v518
        %613 = vmatprep.subr.mxu0 0.0
        %614 = vmatpush1.msra.mxu0 %v519
        %615 = vmatprep.subr.mxu0 0.0
        %616 = vmatpush1.msra.mxu0 %v520
        %617 = vmatprep.subr.mxu0 0.0
        %618 = vmatpush1.msra.mxu0 %v521
        %619 = vmatprep.subr.mxu0 0.0
        %620 = vmatpush1.msra.mxu0 %v522
        %621 = vmatprep.subr.mxu0 0.0
        %622 = vmatpush1.msra.mxu0 %v523
        %623 = vmatprep.subr.mxu0 0.0
        %624 = vmatpush1.msra.mxu0 %v524
        %625 = vmatprep.subr.mxu0 0.0
        %626 = vmatpush1.msra.mxu0 %v525
        %627 = vmatprep.subr.mxu0 0.0
        %628 = vmatpush1.msra.mxu0 %v526
        %629 = vmatprep.subr.mxu0 0.0
        %630 = vmatpush1.msra.mxu0 %v527
        %631 = vmatprep.subr.mxu0 0.0
        %632 = vmatpush1.msra.mxu0 0.0
        %633 = vmatprep.subr.mxu0 0.0
        %634 = vmatpush1.msra.mxu0 0.0
        %635 = vmatprep.subr.mxu0 0.0
        %636 = vmatpush1.msra.mxu0 0.0
        %637 = vmatprep.subr.mxu0 0.0
        %638 = vmatpush1.msra.mxu0 0.0
        %639 = vmatprep.subr.mxu0 0.0
        %640 = vmatpush1.msra.mxu0 0.0
        %641 = vmatprep.subr.mxu0 0.0
        %642 = vmatpush1.msra.mxu0 0.0
        %643 = vmatprep.subr.mxu0 0.0
        %644 = vmatpush1.msra.mxu0 0.0
        %645 = vmatprep.subr.mxu0 0.0
        %646 = vmatpush1.msra.mxu0 0.0
        %647 = vmatprep.subr.mxu0 0.0
        %648 = vmatpush1.msra.mxu0 0.0
        %649 = vmatprep.subr.mxu0 0.0
        %650 = vmatpush1.msra.mxu0 0.0
        %651 = vmatprep.subr.mxu0 0.0
        %652 = vmatpush1.msra.mxu0 0.0
        %653 = vmatprep.subr.mxu0 0.0
        %654 = vmatpush1.msra.mxu0 0.0
        %655 = vmatprep.subr.mxu0 0.0
        %656 = vmatpush1.msra.mxu0 0.0
        %657 = vmatprep.subr.mxu0 0.0
        %658 = vmatpush1.msra.mxu0 0.0
        %659 = vmatprep.subr.mxu0 0.0
        %660 = vmatpush1.msra.mxu0 0.0
        %661 = vmatprep.subr.mxu0 0.0
        %662 = vmatpush1.msra.mxu0 0.0
        %663 = vmatprep.mubr.f32.mxu0 0.0
        %664 = vmatmul.mubr.f32.gmra.mrb[0].mxu0 %v598
        %v665 = vpop.f32.mrb[0].mxu0
        %v666 = vadd.f32 0.0, %v665
        %v667 = vpop.f32.mrb[0].mxu0
        %668 = vdwg.mxu0
        %v669 = vrot.slane %v595, 4
        %v670 = vadd.f32 %v595, %v669
        %v671 = vrot.slane %v670, 2
        %v672 = vadd.f32 %v670, %v671
        %v673 = vrot.slane %v672, 1
        %v674 = vadd.f32 %v672, %v673
        %v675 = vmul.f32 %v674, 0.015625
        %v676 = vrot.slane %v666, 4
        %v677 = vadd.f32 %v666, %v676
        %v678 = vrot.slane %v677, 2
        %v679 = vadd.f32 %v677, %v678
        %v680 = vrot.slane %v679, 1
        %v681 = vadd.f32 %v679, %v680
        %v682 = vmul.f32 %v681, 0.015625
        %v683 = vmul.f32 %v675, %v675
        %v684 = vsub.f32 %v682, %v683
        %v685 = vmax.f32 %v684, 0.0
        %v686 = vadd.f32 %v685, 1e-05
        %v687 = vrsqrt.pop %v686
        %v688 = vsub.f32 %v511, %v675
        %v689 = vmul.f32 %v688, %v687
        %v690 = vld [vmem:[%s3] sm:$0xff]
        %v691 = vmul.f32 %v689, %v690
        %v692 = vld [vmem:[%s4] sm:$0xff]
        %v693 = vadd.f32 %v691, %v692
        %695 = vrot.lane.b32.xlu0 %v693, 120
        %v696 = vpop.permute.xlu0 %695
        %698 = vrot.lane.b32.xlu0 %v693, 112
        %v699 = vpop.permute.xlu0 %698
        %701 = vrot.lane.b32.xlu0 %v693, 104
        %v702 = vpop.permute.xlu0 %701
        %704 = vrot.lane.b32.xlu0 %v693, 96
        %v705 = vpop.permute.xlu0 %704
        %707 = vrot.lane.b32.xlu0 %v693, 88
        %v708 = vpop.permute.xlu0 %707
        %710 = vrot.lane.b32.xlu0 %v693, 80
        %v711 = vpop.permute.xlu0 %710
        %713 = vrot.lane.b32.xlu0 %v693, 72
        %v714 = vpop.permute.xlu0 %713
        %716 = vrot.lane.b32.xlu0 %v693, 64
        %v717 = vpop.permute.xlu0 %716
        %719 = vrot.lane.b32.xlu0 %v693, 56
        %v720 = vpop.permute.xlu0 %719
        %722 = vrot.lane.b32.xlu0 %v693, 48
        %v723 = vpop.permute.xlu0 %722
        %725 = vrot.lane.b32.xlu0 %v693, 40
        %v726 = vpop.permute.xlu0 %725
        %728 = vrot.lane.b32.xlu0 %v693, 32
        %v729 = vpop.permute.xlu0 %728
        %731 = vrot.lane.b32.xlu0 %v693, 24
        %v732 = vpop.permute.xlu0 %731
        %734 = vrot.lane.b32.xlu0 %v693, 16
        %v735 = vpop.permute.xlu0 %734
        %737 = vrot.lane.b32.xlu0 %v693, 8
        %v738 = vpop.permute.xlu0 %737
        %v740 = vpack.c.bf16 %v696, %v693
        %v741 = vpack.c.bf16 %v702, %v699
        %v742 = vpack.c.bf16 %v708, %v705
        %v743 = vpack.c.bf16 %v714, %v711
        %v744 = vpack.c.bf16 %v720, %v717
        %v745 = vpack.c.bf16 %v726, %v723
        %v746 = vpack.c.bf16 %v732, %v729
        %v747 = vpack.c.bf16 %v738, %v735
        %v748 = vld [vmem:[%s6] sm:$0xf]
        %v749 = vld [vmem:[%s7] sm:$0x1]
        %v751 = vlaneseq
        %v752 = vshrl.u32 %v751, 7
        %v753 = vsub.s32 0, %v752
        %v754 = vrot.slane %v749, %v753
        %v757 = vsel %vm462, %v740, 0
        %v760 = vsel %vm462, %v741, 0
        %v763 = vsel %vm462, %v742, 0
        %v766 = vsel %vm462, %v743, 0
        %v769 = vsel %vm462, %v744, 0
        %v772 = vsel %vm462, %v745, 0
        %v775 = vsel %vm462, %v746, 0
        %v778 = vsel %vm462, %v747, 0
        %v781 = vsel %vm466, %v748, 0
        %783 = vmatprep.subr.bf16.mxu0 0
        %784 = vmatpush1.bf16.msra.mxu0 %v781
        %785 = vmatprep.subr.bf16.mxu0 0
        %786 = vmatpush1.bf16.msra.mxu0 0
        %787 = vmatprep.subr.bf16.mxu0 0
        %788 = vmatpush1.bf16.msra.mxu0 0
        %789 = vmatprep.subr.bf16.mxu0 0
        %790 = vmatpush1.bf16.msra.mxu0 0
        %791 = vmatprep.subr.bf16.mxu0 0
        %792 = vmatpush1.bf16.msra.mxu0 0
        %793 = vmatprep.subr.bf16.mxu0 0
        %794 = vmatpush1.bf16.msra.mxu0 0
        %795 = vmatprep.subr.bf16.mxu0 0
        %796 = vmatpush1.bf16.msra.mxu0 0
        %797 = vmatprep.subr.bf16.mxu0 0
        %798 = vmatpush1.bf16.msra.mxu0 0
        %799 = vmatprep.subr.bf16.mxu0 0
        %800 = vmatpush1.bf16.msra.mxu0 0
        %801 = vmatprep.subr.bf16.mxu0 0
        %802 = vmatpush1.bf16.msra.mxu0 0
        %803 = vmatprep.subr.bf16.mxu0 0
        %804 = vmatpush1.bf16.msra.mxu0 0
        %805 = vmatprep.subr.bf16.mxu0 0
        %806 = vmatpush1.bf16.msra.mxu0 0
        %807 = vmatprep.subr.bf16.mxu0 0
        %808 = vmatpush1.bf16.msra.mxu0 0
        %809 = vmatprep.subr.bf16.mxu0 0
        %810 = vmatpush1.bf16.msra.mxu0 0
        %811 = vmatprep.subr.bf16.mxu0 0
        %812 = vmatpush1.bf16.msra.mxu0 0
        %813 = vmatprep.subr.bf16.mxu0 0
        %814 = vmatpush1.bf16.msra.mxu0 0
        %815 = vmatprep.mubr.bf16.mxu0 0
        %816 = vmatmul.mubr.bf16.gmra.mrb[0].mxu0 %v757
        %v817 = vpop.f32.mrb[0].mxu0
        %v818 = vadd.f32 %v754, %v817
        %v819 = vpop.f32.mrb[0].mxu0
        %v820 = vpop.f32.mrb[0].mxu0
        %v821 = vadd.f32 %v754, %v820
        %v822 = vpop.f32.mrb[0].mxu0
        %823 = vmatprep.mubr.bf16.mxu0 0
        %824 = vmatmul.mubr.bf16.gmra.mrb[0].mxu0 %v760
        %v825 = vpop.f32.mrb[0].mxu0
        %v826 = vadd.f32 %v754, %v825
        %v827 = vpop.f32.mrb[0].mxu0
        %v828 = vpop.f32.mrb[0].mxu0
        %v829 = vadd.f32 %v754, %v828
        %v830 = vpop.f32.mrb[0].mxu0
        %831 = vmatprep.mubr.bf16.mxu0 0
        %832 = vmatmul.mubr.bf16.gmra.mrb[0].mxu0 %v763
        %v833 = vpop.f32.mrb[0].mxu0
        %v834 = vadd.f32 %v754, %v833
        %v835 = vpop.f32.mrb[0].mxu0
        %v836 = vpop.f32.mrb[0].mxu0
        %v837 = vadd.f32 %v754, %v836
        %v838 = vpop.f32.mrb[0].mxu0
        %839 = vmatprep.mubr.bf16.mxu0 0
        %840 = vmatmul.mubr.bf16.gmra.mrb[0].mxu0 %v766
        %v841 = vpop.f32.mrb[0].mxu0
        %v842 = vadd.f32 %v754, %v841
        %v843 = vpop.f32.mrb[0].mxu0
        %v844 = vpop.f32.mrb[0].mxu0
        %v845 = vadd.f32 %v754, %v844
        %v846 = vpop.f32.mrb[0].mxu0
        %847 = vmatprep.mubr.bf16.mxu0 0
        %848 = vmatmul.mubr.bf16.gmra.mrb[0].mxu0 %v769
        %v849 = vpop.f32.mrb[0].mxu0
        %v850 = vadd.f32 %v754, %v849
        %v851 = vpop.f32.mrb[0].mxu0
        %v852 = vpop.f32.mrb[0].mxu0
        %v853 = vadd.f32 %v754, %v852
        %v854 = vpop.f32.mrb[0].mxu0
        %855 = vmatprep.mubr.bf16.mxu0 0
        %856 = vmatmul.mubr.bf16.gmra.mrb[0].mxu0 %v772
        %v857 = vpop.f32.mrb[0].mxu0
        %v858 = vadd.f32 %v754, %v857
        %v859 = vpop.f32.mrb[0].mxu0
        %v860 = vpop.f32.mrb[0].mxu0
        %v861 = vadd.f32 %v754, %v860
        %v862 = vpop.f32.mrb[0].mxu0
        %863 = vmatprep.mubr.bf16.mxu0 0
        %864 = vmatmul.mubr.bf16.gmra.mrb[0].mxu0 %v775
        %v865 = vpop.f32.mrb[0].mxu0
        %v866 = vadd.f32 %v754, %v865
        %v867 = vpop.f32.mrb[0].mxu0
        %v868 = vpop.f32.mrb[0].mxu0
        %v869 = vadd.f32 %v754, %v868
        %v870 = vpop.f32.mrb[0].mxu0
        %871 = vmatprep.mubr.bf16.mxu0 0
        %872 = vmatmul.mubr.bf16.gmra.mrb[0].mxu0 %v778
        %v873 = vpop.f32.mrb[0].mxu0
        %v874 = vadd.f32 %v754, %v873
        %v875 = vpop.f32.mrb[0].mxu0
        %v876 = vpop.f32.mrb[0].mxu0
        %v877 = vadd.f32 %v754, %v876
        %v878 = vpop.f32.mrb[0].mxu0
        %879 = vdwg.mxu0
        %v880 = vmax.f32 %v818, 0.0
        %v881 = vmax.f32 %v821, 0.0
        %v882 = vmax.f32 %v826, 0.0
        %v883 = vmax.f32 %v829, 0.0
        %v884 = vmax.f32 %v834, 0.0
        %v885 = vmax.f32 %v837, 0.0
        %v886 = vmax.f32 %v842, 0.0
        %v887 = vmax.f32 %v845, 0.0
        %v888 = vmax.f32 %v850, 0.0
        %v889 = vmax.f32 %v853, 0.0
        %v890 = vmax.f32 %v858, 0.0
        %v891 = vmax.f32 %v861, 0.0
        %v892 = vmax.f32 %v866, 0.0
        %v893 = vmax.f32 %v869, 0.0
        %v894 = vmax.f32 %v874, 0.0
        %v895 = vmax.f32 %v877, 0.0
        %v896 = vpack.c.bf16 %v881, %v880
        %v897 = vpack.c.bf16 %v883, %v882
        %v898 = vpack.c.bf16 %v885, %v884
        %v899 = vpack.c.bf16 %v887, %v886
        %v900 = vpack.c.bf16 %v889, %v888
        %v901 = vpack.c.bf16 %v891, %v890
        %v902 = vpack.c.bf16 %v893, %v892
        %v903 = vpack.c.bf16 %v895, %v894
        %v904 = vld [vmem:[%s8] sm:$0xf]
        %v905 = vld [vmem:[%s8 + $0x4] sm:$0xf]
        %v906 = vld [vmem:[%s8 + $0x8] sm:$0xf]
        %v907 = vld [vmem:[%s8 + $0xc] sm:$0xf]
        %v908 = vld [vmem:[%s9] sm:$0x1]
        %v910 = vlaneseq
        %v911 = vshrl.u32 %v910, 7
        %v912 = vsub.s32 0, %v911
        %v913 = vrot.slane %v908, %v912
        %v919 = vunpack.c.l.b16 %v904
        %v920 = vunpack.c.l.b16 %v905
        %v921 = vunpack.c.l.b16 %v906
        %v922 = vunpack.c.l.b16 %v907
        %v923 = vpack.c.b16 %v920, %v919
        %v924 = vpack.c.b16 %v922, %v921
        %vm927 = vcmask 261120
        %v929 = vsel %vm927, %v896, 0
        %v932 = vsel %vm927, %v897, 0
        %v935 = vsel %vm927, %v898, 0
        %v938 = vsel %vm927, %v899, 0
        %v941 = vsel %vm927, %v900, 0
        %v944 = vsel %vm927, %v901, 0
        %v947 = vsel %vm927, %v902, 0
        %v950 = vsel %vm927, %v903, 0
        %952 = vmatprep.subr.bf16.mxu0 0
        %953 = vmatpush1.bf16.msra.mxu0 %v923
        %954 = vmatprep.subr.bf16.mxu0 0
        %955 = vmatpush1.bf16.msra.mxu0 %v924
        %956 = vmatprep.subr.bf16.mxu0 0
        %957 = vmatpush1.bf16.msra.mxu0 0
        %958 = vmatprep.subr.bf16.mxu0 0
        %959 = vmatpush1.bf16.msra.mxu0 0
        %960 = vmatprep.subr.bf16.mxu0 0
        %961 = vmatpush1.bf16.msra.mxu0 0
        %962 = vmatprep.subr.bf16.mxu0 0
        %963 = vmatpush1.bf16.msra.mxu0 0
        %964 = vmatprep.subr.bf16.mxu0 0
        %965 = vmatpush1.bf16.msra.mxu0 0
        %966 = vmatprep.subr.bf16.mxu0 0
        %967 = vmatpush1.bf16.msra.mxu0 0
        %968 = vmatprep.subr.bf16.mxu0 0
        %969 = vmatpush1.bf16.msra.mxu0 0
        %970 = vmatprep.subr.bf16.mxu0 0
        %971 = vmatpush1.bf16.msra.mxu0 0
        %972 = vmatprep.subr.bf16.mxu0 0
        %973 = vmatpush1.bf16.msra.mxu0 0
        %974 = vmatprep.subr.bf16.mxu0 0
        %975 = vmatpush1.bf16.msra.mxu0 0
        %976 = vmatprep.subr.bf16.mxu0 0
        %977 = vmatpush1.bf16.msra.mxu0 0
        %978 = vmatprep.subr.bf16.mxu0 0
        %979 = vmatpush1.bf16.msra.mxu0 0
        %980 = vmatprep.subr.bf16.mxu0 0
        %981 = vmatpush1.bf16.msra.mxu0 0
        %982 = vmatprep.subr.bf16.mxu0 0
        %983 = vmatpush1.bf16.msra.mxu0 0
        %984 = vmatprep.mubr.bf16.mxu0 0
        %985 = vmatmul.mubr.bf16.gmra.mrb[0].mxu0 %v929
        %v986 = vpop.f32.mrb[0].mxu0
        %v987 = vadd.f32 %v913, %v986
        %v988 = vpop.f32.mrb[0].mxu0
        %v989 = vpop.f32.mrb[0].mxu0
        %v990 = vadd.f32 %v913, %v989
        %v991 = vpop.f32.mrb[0].mxu0
        %992 = vmatprep.mubr.bf16.mxu0 0
        %993 = vmatmul.mubr.bf16.gmra.mrb[0].mxu0 %v932
        %v994 = vpop.f32.mrb[0].mxu0
        %v995 = vadd.f32 %v913, %v994
        %v996 = vpop.f32.mrb[0].mxu0
        %v997 = vpop.f32.mrb[0].mxu0
        %v998 = vadd.f32 %v913, %v997
        %v999 = vpop.f32.mrb[0].mxu0
        %1000 = vmatprep.mubr.bf16.mxu0 0
        %1001 = vmatmul.mubr.bf16.gmra.mrb[0].mxu0 %v935
        %v1002 = vpop.f32.mrb[0].mxu0
        %v1003 = vadd.f32 %v913, %v1002
        %v1004 = vpop.f32.mrb[0].mxu0
        %v1005 = vpop.f32.mrb[0].mxu0
        %v1006 = vadd.f32 %v913, %v1005
        %v1007 = vpop.f32.mrb[0].mxu0
        %1008 = vmatprep.mubr.bf16.mxu0 0
        %1009 = vmatmul.mubr.bf16.gmra.mrb[0].mxu0 %v938
        %v1010 = vpop.f32.mrb[0].mxu0
        %v1011 = vadd.f32 %v913, %v1010
        %v1012 = vpop.f32.mrb[0].mxu0
        %v1013 = vpop.f32.mrb[0].mxu0
        %v1014 = vadd.f32 %v913, %v1013
        %v1015 = vpop.f32.mrb[0].mxu0
        %1016 = vmatprep.mubr.bf16.mxu0 0
        %1017 = vmatmul.mubr.bf16.gmra.mrb[0].mxu0 %v941
        %v1018 = vpop.f32.mrb[0].mxu0
        %v1019 = vadd.f32 %v913, %v1018
        %v1020 = vpop.f32.mrb[0].mxu0
        %v1021 = vpop.f32.mrb[0].mxu0
        %v1022 = vadd.f32 %v913, %v1021
        %v1023 = vpop.f32.mrb[0].mxu0
        %1024 = vmatprep.mubr.bf16.mxu0 0
        %1025 = vmatmul.mubr.bf16.gmra.mrb[0].mxu0 %v944
        %v1026 = vpop.f32.mrb[0].mxu0
        %v1027 = vadd.f32 %v913, %v1026
        %v1028 = vpop.f32.mrb[0].mxu0
        %v1029 = vpop.f32.mrb[0].mxu0
        %v1030 = vadd.f32 %v913, %v1029
        %v1031 = vpop.f32.mrb[0].mxu0
        %1032 = vmatprep.mubr.bf16.mxu0 0
        %1033 = vmatmul.mubr.bf16.gmra.mrb[0].mxu0 %v947
        %v1034 = vpop.f32.mrb[0].mxu0
        %v1035 = vadd.f32 %v913, %v1034
        %v1036 = vpop.f32.mrb[0].mxu0
        %v1037 = vpop.f32.mrb[0].mxu0
        %v1038 = vadd.f32 %v913, %v1037
        %v1039 = vpop.f32.mrb[0].mxu0
        %1040 = vmatprep.mubr.bf16.mxu0 0
        %1041 = vmatmul.mubr.bf16.gmra.mrb[0].mxu0 %v950
        %v1042 = vpop.f32.mrb[0].mxu0
        %v1043 = vadd.f32 %v913, %v1042
        %v1044 = vpop.f32.mrb[0].mxu0
        %v1045 = vpop.f32.mrb[0].mxu0
        %v1046 = vadd.f32 %v913, %v1045
        %v1047 = vpop.f32.mrb[0].mxu0
        %1048 = vdwg.mxu0
        %1065 = vrot.lane.b32.xlu0 %v987, 32
        %v1066 = vpop.permute.xlu0 %1065
        %1067 = vrot.lane.b32.xlu0 %v990, 32
        %v1068 = vpop.permute.xlu0 %1067
        %1069 = vrot.lane.b32.xlu0 %v995, 32
        %v1070 = vpop.permute.xlu0 %1069
        %1071 = vrot.lane.b32.xlu0 %v998, 32
        %v1072 = vpop.permute.xlu0 %1071
        %1073 = vrot.lane.b32.xlu0 %v1003, 32
        %v1074 = vpop.permute.xlu0 %1073
        %1075 = vrot.lane.b32.xlu0 %v1006, 32
        %v1076 = vpop.permute.xlu0 %1075
        %1077 = vrot.lane.b32.xlu0 %v1011, 32
        %v1078 = vpop.permute.xlu0 %1077
        %1079 = vrot.lane.b32.xlu0 %v1014, 32
        %v1080 = vpop.permute.xlu0 %1079
        %1081 = vrot.lane.b32.xlu0 %v1019, 32
        %v1082 = vpop.permute.xlu0 %1081
        %1083 = vrot.lane.b32.xlu0 %v1022, 32
        %v1084 = vpop.permute.xlu0 %1083
        %1085 = vrot.lane.b32.xlu0 %v1027, 32
        %v1086 = vpop.permute.xlu0 %1085
        %1087 = vrot.lane.b32.xlu0 %v1030, 32
        %v1088 = vpop.permute.xlu0 %1087
        %1089 = vrot.lane.b32.xlu0 %v1035, 32
        %v1090 = vpop.permute.xlu0 %1089
        %1091 = vrot.lane.b32.xlu0 %v1038, 32
        %v1092 = vpop.permute.xlu0 %1091
        %1093 = vrot.lane.b32.xlu0 %v1043, 32
        %v1094 = vpop.permute.xlu0 %1093
        %1095 = vrot.lane.b32.xlu0 %v1046, 32
        %v1096 = vpop.permute.xlu0 %1095
        %v1113 = vadd.f32 %v818, %v1066
        %v1114 = vadd.f32 %v821, %v1068
        %v1115 = vadd.f32 %v826, %v1070
        %v1116 = vadd.f32 %v829, %v1072
        %v1117 = vadd.f32 %v834, %v1074
        %v1118 = vadd.f32 %v837, %v1076
        %v1119 = vadd.f32 %v842, %v1078
        %v1120 = vadd.f32 %v845, %v1080
        %v1121 = vadd.f32 %v850, %v1082
        %v1122 = vadd.f32 %v853, %v1084
        %v1123 = vadd.f32 %v858, %v1086
        %v1124 = vadd.f32 %v861, %v1088
        %v1125 = vadd.f32 %v866, %v1090
        %v1126 = vadd.f32 %v869, %v1092
        %v1127 = vadd.f32 %v874, %v1094
        %v1128 = vadd.f32 %v877, %v1096
        %v1129 = vld [vmem:[%s10] sm:$0xff]
        %v1130 = vld [vmem:[%s10 + $0x8] sm:$0xff]
        %v1131 = vld [vmem:[%s10 + $0x10] sm:$0xff]
        %v1132 = vld [vmem:[%s10 + $0x18] sm:$0xff]
        %v1133 = vld [vmem:[%s10 + $0x20] sm:$0xff]
        %v1134 = vld [vmem:[%s10 + $0x28] sm:$0xff]
        %v1135 = vld [vmem:[%s10 + $0x30] sm:$0xff]
        %v1136 = vld [vmem:[%s10 + $0x38] sm:$0xff]
        %v1137 = vld [vmem:[%s10 + $0x40] sm:$0xff]
        %v1138 = vld [vmem:[%s10 + $0x48] sm:$0xff]
        %v1139 = vld [vmem:[%s10 + $0x50] sm:$0xff]
        %v1140 = vld [vmem:[%s10 + $0x58] sm:$0xff]
        %v1141 = vld [vmem:[%s10 + $0x60] sm:$0xff]
        %v1142 = vld [vmem:[%s10 + $0x68] sm:$0xff]
        %v1143 = vld [vmem:[%s10 + $0x70] sm:$0xff]
        %v1144 = vld [vmem:[%s10 + $0x78] sm:$0xff]
        %1161 = vrot.lane.b32.xlu0 %v1113, 96
        %v1162 = vpop.permute.xlu0 %1161
        %1163 = vrot.lane.b32.xlu0 %v1114, 96
        %v1164 = vpop.permute.xlu0 %1163
        %1165 = vrot.lane.b32.xlu0 %v1115, 96
        %v1166 = vpop.permute.xlu0 %1165
        %1167 = vrot.lane.b32.xlu0 %v1116, 96
        %v1168 = vpop.permute.xlu0 %1167
        %1169 = vrot.lane.b32.xlu0 %v1117, 96
        %v1170 = vpop.permute.xlu0 %1169
        %1171 = vrot.lane.b32.xlu0 %v1118, 96
        %v1172 = vpop.permute.xlu0 %1171
        %1173 = vrot.lane.b32.xlu0 %v1119, 96
        %v1174 = vpop.permute.xlu0 %1173
        %1175 = vrot.lane.b32.xlu0 %v1120, 96
        %v1176 = vpop.permute.xlu0 %1175
        %1177 = vrot.lane.b32.xlu0 %v1121, 96
        %v1178 = vpop.permute.xlu0 %1177
        %1179 = vrot.lane.b32.xlu0 %v1122, 96
        %v1180 = vpop.permute.xlu0 %1179
        %1181 = vrot.lane.b32.xlu0 %v1123, 96
        %v1182 = vpop.permute.xlu0 %1181
        %1183 = vrot.lane.b32.xlu0 %v1124, 96
        %v1184 = vpop.permute.xlu0 %1183
        %1185 = vrot.lane.b32.xlu0 %v1125, 96
        %v1186 = vpop.permute.xlu0 %1185
        %1187 = vrot.lane.b32.xlu0 %v1126, 96
        %v1188 = vpop.permute.xlu0 %1187
        %1189 = vrot.lane.b32.xlu0 %v1127, 96
        %v1190 = vpop.permute.xlu0 %1189
        %1191 = vrot.lane.b32.xlu0 %v1128, 96
        %v1192 = vpop.permute.xlu0 %1191
        %1209 = vmatprep.subr.mxu0 0.0
        %1210 = vmatpush1.msra.mxu0 %v1162
        %1211 = vmatprep.subr.mxu0 0.0
        %1212 = vmatpush1.msra.mxu0 %v1164
        %1213 = vmatprep.subr.mxu0 0.0
        %1214 = vmatpush1.msra.mxu0 %v1166
        %1215 = vmatprep.subr.mxu0 0.0
        %1216 = vmatpush1.msra.mxu0 %v1168
        %1217 = vmatprep.subr.mxu0 0.0
        %1218 = vmatpush1.msra.mxu0 %v1170
        %1219 = vmatprep.subr.mxu0 0.0
        %1220 = vmatpush1.msra.mxu0 %v1172
        %1221 = vmatprep.subr.mxu0 0.0
        %1222 = vmatpush1.msra.mxu0 %v1174
        %1223 = vmatprep.subr.mxu0 0.0
        %1224 = vmatpush1.msra.mxu0 %v1176
        %1225 = vmatprep.subr.mxu0 0.0
        %1226 = vmatpush1.msra.mxu0 %v1178
        %1227 = vmatprep.subr.mxu0 0.0
        %1228 = vmatpush1.msra.mxu0 %v1180
        %1229 = vmatprep.subr.mxu0 0.0
        %1230 = vmatpush1.msra.mxu0 %v1182
        %1231 = vmatprep.subr.mxu0 0.0
        %1232 = vmatpush1.msra.mxu0 %v1184
        %1233 = vmatprep.subr.mxu0 0.0
        %1234 = vmatpush1.msra.mxu0 %v1186
        %1235 = vmatprep.subr.mxu0 0.0
        %1236 = vmatpush1.msra.mxu0 %v1188
        %1237 = vmatprep.subr.mxu0 0.0
        %1238 = vmatpush1.msra.mxu0 %v1190
        %1239 = vmatprep.subr.mxu0 0.0
        %1240 = vmatpush1.msra.mxu0 %v1192
        %1241 = vmatprep.subr.mxu0 0.0
        %1242 = vmatpush1.msra.mxu0 0.0
        %1243 = vmatprep.subr.mxu0 0.0
        %1244 = vmatpush1.msra.mxu0 0.0
        %1245 = vmatprep.subr.mxu0 0.0
        %1246 = vmatpush1.msra.mxu0 0.0
        %1247 = vmatprep.subr.mxu0 0.0
        %1248 = vmatpush1.msra.mxu0 0.0
        %1249 = vmatprep.subr.mxu0 0.0
        %1250 = vmatpush1.msra.mxu0 0.0
        %1251 = vmatprep.subr.mxu0 0.0
        %1252 = vmatpush1.msra.mxu0 0.0
        %1253 = vmatprep.subr.mxu0 0.0
        %1254 = vmatpush1.msra.mxu0 0.0
        %1255 = vmatprep.subr.mxu0 0.0
        %1256 = vmatpush1.msra.mxu0 0.0
        %1257 = vmatprep.subr.mxu0 0.0
        %1258 = vmatpush1.msra.mxu0 0.0
        %1259 = vmatprep.subr.mxu0 0.0
        %1260 = vmatpush1.msra.mxu0 0.0
        %1261 = vmatprep.subr.mxu0 0.0
        %1262 = vmatpush1.msra.mxu0 0.0
        %1263 = vmatprep.subr.mxu0 0.0
        %1264 = vmatpush1.msra.mxu0 0.0
        %1265 = vmatprep.subr.mxu0 0.0
        %1266 = vmatpush1.msra.mxu0 0.0
        %1267 = vmatprep.subr.mxu0 0.0
        %1268 = vmatpush1.msra.mxu0 0.0
        %1269 = vmatprep.subr.mxu0 0.0
        %1270 = vmatpush1.msra.mxu0 0.0
        %1271 = vmatprep.subr.mxu0 0.0
        %1272 = vmatpush1.msra.mxu0 0.0
        %1273 = vmatprep.mubr.f32.mxu0 0.0
        %1274 = vmatmul.mubr.f32.gmra.mrb[0].mxu0 %v1129
        %v1275 = vpop.f32.mrb[0].mxu0
        %v1276 = vadd.f32 0.0, %v1275
        %v1277 = vpop.f32.mrb[0].mxu0
        %1278 = vmatprep.mubr.f32.mxu0 0.0
        %1279 = vmatmul.mubr.f32.gmra.mrb[0].mxu0 %v1130
        %v1280 = vpop.f32.mrb[0].mxu0
        %v1281 = vadd.f32 0.0, %v1280
        %v1282 = vpop.f32.mrb[0].mxu0
        %1283 = vmatprep.mubr.f32.mxu0 0.0
        %1284 = vmatmul.mubr.f32.gmra.mrb[0].mxu0 %v1131
        %v1285 = vpop.f32.mrb[0].mxu0
        %v1286 = vadd.f32 0.0, %v1285
        %v1287 = vpop.f32.mrb[0].mxu0
        %1288 = vmatprep.mubr.f32.mxu0 0.0
        %1289 = vmatmul.mubr.f32.gmra.mrb[0].mxu0 %v1132
        %v1290 = vpop.f32.mrb[0].mxu0
        %v1291 = vadd.f32 0.0, %v1290
        %v1292 = vpop.f32.mrb[0].mxu0
        %1293 = vmatprep.mubr.f32.mxu0 0.0
        %1294 = vmatmul.mubr.f32.gmra.mrb[0].mxu0 %v1133
        %v1295 = vpop.f32.mrb[0].mxu0
        %v1296 = vadd.f32 0.0, %v1295
        %v1297 = vpop.f32.mrb[0].mxu0
        %1298 = vmatprep.mubr.f32.mxu0 0.0
        %1299 = vmatmul.mubr.f32.gmra.mrb[0].mxu0 %v1134
        %v1300 = vpop.f32.mrb[0].mxu0
        %v1301 = vadd.f32 0.0, %v1300
        %v1302 = vpop.f32.mrb[0].mxu0
        %1303 = vmatprep.mubr.f32.mxu0 0.0
        %1304 = vmatmul.mubr.f32.gmra.mrb[0].mxu0 %v1135
        %v1305 = vpop.f32.mrb[0].mxu0
        %v1306 = vadd.f32 0.0, %v1305
        %v1307 = vpop.f32.mrb[0].mxu0
        %1308 = vmatprep.mubr.f32.mxu0 0.0
        %1309 = vmatmul.mubr.f32.gmra.mrb[0].mxu0 %v1136
        %v1310 = vpop.f32.mrb[0].mxu0
        %v1311 = vadd.f32 0.0, %v1310
        %v1312 = vpop.f32.mrb[0].mxu0
        %1313 = vmatprep.mubr.f32.mxu0 0.0
        %1314 = vmatmul.mubr.f32.gmra.mrb[0].mxu0 %v1137
        %v1315 = vpop.f32.mrb[0].mxu0
        %v1316 = vadd.f32 0.0, %v1315
        %v1317 = vpop.f32.mrb[0].mxu0
        %1318 = vmatprep.mubr.f32.mxu0 0.0
        %1319 = vmatmul.mubr.f32.gmra.mrb[0].mxu0 %v1138
        %v1320 = vpop.f32.mrb[0].mxu0
        %v1321 = vadd.f32 0.0, %v1320
        %v1322 = vpop.f32.mrb[0].mxu0
        %1323 = vmatprep.mubr.f32.mxu0 0.0
        %1324 = vmatmul.mubr.f32.gmra.mrb[0].mxu0 %v1139
        %v1325 = vpop.f32.mrb[0].mxu0
        %v1326 = vadd.f32 0.0, %v1325
        %v1327 = vpop.f32.mrb[0].mxu0
        %1328 = vmatprep.mubr.f32.mxu0 0.0
        %1329 = vmatmul.mubr.f32.gmra.mrb[0].mxu0 %v1140
        %v1330 = vpop.f32.mrb[0].mxu0
        %v1331 = vadd.f32 0.0, %v1330
        %v1332 = vpop.f32.mrb[0].mxu0
        %1333 = vmatprep.mubr.f32.mxu0 0.0
        %1334 = vmatmul.mubr.f32.gmra.mrb[0].mxu0 %v1141
        %v1335 = vpop.f32.mrb[0].mxu0
        %v1336 = vadd.f32 0.0, %v1335
        %v1337 = vpop.f32.mrb[0].mxu0
        %1338 = vmatprep.mubr.f32.mxu0 0.0
        %1339 = vmatmul.mubr.f32.gmra.mrb[0].mxu0 %v1142
        %v1340 = vpop.f32.mrb[0].mxu0
        %v1341 = vadd.f32 0.0, %v1340
        %v1342 = vpop.f32.mrb[0].mxu0
        %1343 = vmatprep.mubr.f32.mxu0 0.0
        %1344 = vmatmul.mubr.f32.gmra.mrb[0].mxu0 %v1143
        %v1345 = vpop.f32.mrb[0].mxu0
        %v1346 = vadd.f32 0.0, %v1345
        %v1347 = vpop.f32.mrb[0].mxu0
        %1348 = vmatprep.mubr.f32.mxu0 0.0
        %1349 = vmatmul.mubr.f32.gmra.mrb[0].mxu0 %v1144
        %v1350 = vpop.f32.mrb[0].mxu0
        %v1351 = vadd.f32 0.0, %v1350
        %v1352 = vpop.f32.mrb[0].mxu0
        %1353 = vdwg.mxu0
        %v1354 = vmul.f32 %v1113, %v1113
        %v1355 = vmul.f32 %v1114, %v1114
        %v1356 = vmul.f32 %v1115, %v1115
        %v1357 = vmul.f32 %v1116, %v1116
        %v1358 = vmul.f32 %v1117, %v1117
        %v1359 = vmul.f32 %v1118, %v1118
        %v1360 = vmul.f32 %v1119, %v1119
        %v1361 = vmul.f32 %v1120, %v1120
        %v1362 = vmul.f32 %v1121, %v1121
        %v1363 = vmul.f32 %v1122, %v1122
        %v1364 = vmul.f32 %v1123, %v1123
        %v1365 = vmul.f32 %v1124, %v1124
        %v1366 = vmul.f32 %v1125, %v1125
        %v1367 = vmul.f32 %v1126, %v1126
        %v1368 = vmul.f32 %v1127, %v1127
        %v1369 = vmul.f32 %v1128, %v1128
        %1386 = vrot.lane.b32.xlu0 %v1354, 96
        %v1387 = vpop.permute.xlu0 %1386
        %1388 = vrot.lane.b32.xlu0 %v1355, 96
        %v1389 = vpop.permute.xlu0 %1388
        %1390 = vrot.lane.b32.xlu0 %v1356, 96
        %v1391 = vpop.permute.xlu0 %1390
        %1392 = vrot.lane.b32.xlu0 %v1357, 96
        %v1393 = vpop.permute.xlu0 %1392
        %1394 = vrot.lane.b32.xlu0 %v1358, 96
        %v1395 = vpop.permute.xlu0 %1394
        %1396 = vrot.lane.b32.xlu0 %v1359, 96
        %v1397 = vpop.permute.xlu0 %1396
        %1398 = vrot.lane.b32.xlu0 %v1360, 96
        %v1399 = vpop.permute.xlu0 %1398
        %1400 = vrot.lane.b32.xlu0 %v1361, 96
        %v1401 = vpop.permute.xlu0 %1400
        %1402 = vrot.lane.b32.xlu0 %v1362, 96
        %v1403 = vpop.permute.xlu0 %1402
        %1404 = vrot.lane.b32.xlu0 %v1363, 96
        %v1405 = vpop.permute.xlu0 %1404
        %1406 = vrot.lane.b32.xlu0 %v1364, 96
        %v1407 = vpop.permute.xlu0 %1406
        %1408 = vrot.lane.b32.xlu0 %v1365, 96
        %v1409 = vpop.permute.xlu0 %1408
        %1410 = vrot.lane.b32.xlu0 %v1366, 96
        %v1411 = vpop.permute.xlu0 %1410
        %1412 = vrot.lane.b32.xlu0 %v1367, 96
        %v1413 = vpop.permute.xlu0 %1412
        %1414 = vrot.lane.b32.xlu0 %v1368, 96
        %v1415 = vpop.permute.xlu0 %1414
        %1416 = vrot.lane.b32.xlu0 %v1369, 96
        %v1417 = vpop.permute.xlu0 %1416
        %1434 = vmatprep.subr.mxu0 0.0
        %1435 = vmatpush1.msra.mxu0 %v1387
        %1436 = vmatprep.subr.mxu0 0.0
        %1437 = vmatpush1.msra.mxu0 %v1389
        %1438 = vmatprep.subr.mxu0 0.0
        %1439 = vmatpush1.msra.mxu0 %v1391
        %1440 = vmatprep.subr.mxu0 0.0
        %1441 = vmatpush1.msra.mxu0 %v1393
        %1442 = vmatprep.subr.mxu0 0.0
        %1443 = vmatpush1.msra.mxu0 %v1395
        %1444 = vmatprep.subr.mxu0 0.0
        %1445 = vmatpush1.msra.mxu0 %v1397
        %1446 = vmatprep.subr.mxu0 0.0
        %1447 = vmatpush1.msra.mxu0 %v1399
        %1448 = vmatprep.subr.mxu0 0.0
        %1449 = vmatpush1.msra.mxu0 %v1401
        %1450 = vmatprep.subr.mxu0 0.0
        %1451 = vmatpush1.msra.mxu0 %v1403
        %1452 = vmatprep.subr.mxu0 0.0
        %1453 = vmatpush1.msra.mxu0 %v1405
        %1454 = vmatprep.subr.mxu0 0.0
        %1455 = vmatpush1.msra.mxu0 %v1407
        %1456 = vmatprep.subr.mxu0 0.0
        %1457 = vmatpush1.msra.mxu0 %v1409
        %1458 = vmatprep.subr.mxu0 0.0
        %1459 = vmatpush1.msra.mxu0 %v1411
        %1460 = vmatprep.subr.mxu0 0.0
        %1461 = vmatpush1.msra.mxu0 %v1413
        %1462 = vmatprep.subr.mxu0 0.0
        %1463 = vmatpush1.msra.mxu0 %v1415
        %1464 = vmatprep.subr.mxu0 0.0
        %1465 = vmatpush1.msra.mxu0 %v1417
        %1466 = vmatprep.subr.mxu0 0.0
        %1467 = vmatpush1.msra.mxu0 0.0
        %1468 = vmatprep.subr.mxu0 0.0
        %1469 = vmatpush1.msra.mxu0 0.0
        %1470 = vmatprep.subr.mxu0 0.0
        %1471 = vmatpush1.msra.mxu0 0.0
        %1472 = vmatprep.subr.mxu0 0.0
        %1473 = vmatpush1.msra.mxu0 0.0
        %1474 = vmatprep.subr.mxu0 0.0
        %1475 = vmatpush1.msra.mxu0 0.0
        %1476 = vmatprep.subr.mxu0 0.0
        %1477 = vmatpush1.msra.mxu0 0.0
        %1478 = vmatprep.subr.mxu0 0.0
        %1479 = vmatpush1.msra.mxu0 0.0
        %1480 = vmatprep.subr.mxu0 0.0
        %1481 = vmatpush1.msra.mxu0 0.0
        %1482 = vmatprep.subr.mxu0 0.0
        %1483 = vmatpush1.msra.mxu0 0.0
        %1484 = vmatprep.subr.mxu0 0.0
        %1485 = vmatpush1.msra.mxu0 0.0
        %1486 = vmatprep.subr.mxu0 0.0
        %1487 = vmatpush1.msra.mxu0 0.0
        %1488 = vmatprep.subr.mxu0 0.0
        %1489 = vmatpush1.msra.mxu0 0.0
        %1490 = vmatprep.subr.mxu0 0.0
        %1491 = vmatpush1.msra.mxu0 0.0
        %1492 = vmatprep.subr.mxu0 0.0
        %1493 = vmatpush1.msra.mxu0 0.0
        %1494 = vmatprep.subr.mxu0 0.0
        %1495 = vmatpush1.msra.mxu0 0.0
        %1496 = vmatprep.subr.mxu0 0.0
        %1497 = vmatpush1.msra.mxu0 0.0
        %1498 = vmatprep.mubr.f32.mxu0 0.0
        %1499 = vmatmul.mubr.f32.gmra.mrb[0].mxu0 %v1129
        %v1500 = vpop.f32.mrb[0].mxu0
        %v1501 = vadd.f32 0.0, %v1500
        %v1502 = vpop.f32.mrb[0].mxu0
        %1503 = vmatprep.mubr.f32.mxu0 0.0
        %1504 = vmatmul.mubr.f32.gmra.mrb[0].mxu0 %v1130
        %v1505 = vpop.f32.mrb[0].mxu0
        %v1506 = vadd.f32 0.0, %v1505
        %v1507 = vpop.f32.mrb[0].mxu0
        %1508 = vmatprep.mubr.f32.mxu0 0.0
        %1509 = vmatmul.mubr.f32.gmra.mrb[0].mxu0 %v1131
        %v1510 = vpop.f32.mrb[0].mxu0
        %v1511 = vadd.f32 0.0, %v1510
        %v1512 = vpop.f32.mrb[0].mxu0
        %1513 = vmatprep.mubr.f32.mxu0 0.0
        %1514 = vmatmul.mubr.f32.gmra.mrb[0].mxu0 %v1132
        %v1515 = vpop.f32.mrb[0].mxu0
        %v1516 = vadd.f32 0.0, %v1515
        %v1517 = vpop.f32.mrb[0].mxu0
        %1518 = vmatprep.mubr.f32.mxu0 0.0
        %1519 = vmatmul.mubr.f32.gmra.mrb[0].mxu0 %v1133
        %v1520 = vpop.f32.mrb[0].mxu0
        %v1521 = vadd.f32 0.0, %v1520
        %v1522 = vpop.f32.mrb[0].mxu0
        %1523 = vmatprep.mubr.f32.mxu0 0.0
        %1524 = vmatmul.mubr.f32.gmra.mrb[0].mxu0 %v1134
        %v1525 = vpop.f32.mrb[0].mxu0
        %v1526 = vadd.f32 0.0, %v1525
        %v1527 = vpop.f32.mrb[0].mxu0
        %1528 = vmatprep.mubr.f32.mxu0 0.0
        %1529 = vmatmul.mubr.f32.gmra.mrb[0].mxu0 %v1135
        %v1530 = vpop.f32.mrb[0].mxu0
        %v1531 = vadd.f32 0.0, %v1530
        %v1532 = vpop.f32.mrb[0].mxu0
        %1533 = vmatprep.mubr.f32.mxu0 0.0
        %1534 = vmatmul.mubr.f32.gmra.mrb[0].mxu0 %v1136
        %v1535 = vpop.f32.mrb[0].mxu0
        %v1536 = vadd.f32 0.0, %v1535
        %v1537 = vpop.f32.mrb[0].mxu0
        %1538 = vmatprep.mubr.f32.mxu0 0.0
        %1539 = vmatmul.mubr.f32.gmra.mrb[0].mxu0 %v1137
        %v1540 = vpop.f32.mrb[0].mxu0
        %v1541 = vadd.f32 0.0, %v1540
        %v1542 = vpop.f32.mrb[0].mxu0
        %1543 = vmatprep.mubr.f32.mxu0 0.0
        %1544 = vmatmul.mubr.f32.gmra.mrb[0].mxu0 %v1138
        %v1545 = vpop.f32.mrb[0].mxu0
        %v1546 = vadd.f32 0.0, %v1545
        %v1547 = vpop.f32.mrb[0].mxu0
        %1548 = vmatprep.mubr.f32.mxu0 0.0
        %1549 = vmatmul.mubr.f32.gmra.mrb[0].mxu0 %v1139
        %v1550 = vpop.f32.mrb[0].mxu0
        %v1551 = vadd.f32 0.0, %v1550
        %v1552 = vpop.f32.mrb[0].mxu0
        %1553 = vmatprep.mubr.f32.mxu0 0.0
        %1554 = vmatmul.mubr.f32.gmra.mrb[0].mxu0 %v1140
        %v1555 = vpop.f32.mrb[0].mxu0
        %v1556 = vadd.f32 0.0, %v1555
        %v1557 = vpop.f32.mrb[0].mxu0
        %1558 = vmatprep.mubr.f32.mxu0 0.0
        %1559 = vmatmul.mubr.f32.gmra.mrb[0].mxu0 %v1141
        %v1560 = vpop.f32.mrb[0].mxu0
        %v1561 = vadd.f32 0.0, %v1560
        %v1562 = vpop.f32.mrb[0].mxu0
        %1563 = vmatprep.mubr.f32.mxu0 0.0
        %1564 = vmatmul.mubr.f32.gmra.mrb[0].mxu0 %v1142
        %v1565 = vpop.f32.mrb[0].mxu0
        %v1566 = vadd.f32 0.0, %v1565
        %v1567 = vpop.f32.mrb[0].mxu0
        %1568 = vmatprep.mubr.f32.mxu0 0.0
        %1569 = vmatmul.mubr.f32.gmra.mrb[0].mxu0 %v1143
        %v1570 = vpop.f32.mrb[0].mxu0
        %v1571 = vadd.f32 0.0, %v1570
        %v1572 = vpop.f32.mrb[0].mxu0
        %1573 = vmatprep.mubr.f32.mxu0 0.0
        %1574 = vmatmul.mubr.f32.gmra.mrb[0].mxu0 %v1144
        %v1575 = vpop.f32.mrb[0].mxu0
        %v1576 = vadd.f32 0.0, %v1575
        %v1577 = vpop.f32.mrb[0].mxu0
        %1578 = vdwg.mxu0
        %vm1579 = vcmask 130048
        %v1580 = vsel %vm1579, %v1276, 0.0
        %1581 = vadd.xlane.f32.xlu0 %v1580
        %v1582 = vpop.xlane.xlu0 %1581
        %v1583 = vsel %vm1579, %v1281, 0.0
        %1584 = vadd.xlane.f32.xlu0 %v1583
        %v1585 = vpop.xlane.xlu0 %1584
        %v1586 = vsel %vm1579, %v1286, 0.0
        %1587 = vadd.xlane.f32.xlu0 %v1586
        %v1588 = vpop.xlane.xlu0 %1587
        %v1589 = vsel %vm1579, %v1291, 0.0
        %1590 = vadd.xlane.f32.xlu0 %v1589
        %v1591 = vpop.xlane.xlu0 %1590
        %v1592 = vsel %vm1579, %v1296, 0.0
        %1593 = vadd.xlane.f32.xlu0 %v1592
        %v1594 = vpop.xlane.xlu0 %1593
        %v1595 = vsel %vm1579, %v1301, 0.0
        %1596 = vadd.xlane.f32.xlu0 %v1595
        %v1597 = vpop.xlane.xlu0 %1596
        %v1598 = vsel %vm1579, %v1306, 0.0
        %1599 = vadd.xlane.f32.xlu0 %v1598
        %v1600 = vpop.xlane.xlu0 %1599
        %v1601 = vsel %vm1579, %v1311, 0.0
        %1602 = vadd.xlane.f32.xlu0 %v1601
        %v1603 = vpop.xlane.xlu0 %1602
        %v1604 = vsel %vm1579, %v1316, 0.0
        %1605 = vadd.xlane.f32.xlu0 %v1604
        %v1606 = vpop.xlane.xlu0 %1605
        %v1607 = vsel %vm1579, %v1321, 0.0
        %1608 = vadd.xlane.f32.xlu0 %v1607
        %v1609 = vpop.xlane.xlu0 %1608
        %v1610 = vsel %vm1579, %v1326, 0.0
        %1611 = vadd.xlane.f32.xlu0 %v1610
        %v1612 = vpop.xlane.xlu0 %1611
        %v1613 = vsel %vm1579, %v1331, 0.0
        %1614 = vadd.xlane.f32.xlu0 %v1613
        %v1615 = vpop.xlane.xlu0 %1614
        %v1616 = vsel %vm1579, %v1336, 0.0
        %1617 = vadd.xlane.f32.xlu0 %v1616
        %v1618 = vpop.xlane.xlu0 %1617
        %v1619 = vsel %vm1579, %v1341, 0.0
        %1620 = vadd.xlane.f32.xlu0 %v1619
        %v1621 = vpop.xlane.xlu0 %1620
        %v1622 = vsel %vm1579, %v1346, 0.0
        %1623 = vadd.xlane.f32.xlu0 %v1622
        %v1624 = vpop.xlane.xlu0 %1623
        %v1625 = vsel %vm1579, %v1351, 0.0
        %1626 = vadd.xlane.f32.xlu0 %v1625
        %v1627 = vpop.xlane.xlu0 %1626
        %v1628 = vmul.f32 %v1582, 0.0078125
        %v1629 = vmul.f32 %v1585, 0.0078125
        %v1630 = vmul.f32 %v1588, 0.0078125
        %v1631 = vmul.f32 %v1591, 0.0078125
        %v1632 = vmul.f32 %v1594, 0.0078125
        %v1633 = vmul.f32 %v1597, 0.0078125
        %v1634 = vmul.f32 %v1600, 0.0078125
        %v1635 = vmul.f32 %v1603, 0.0078125
        %v1636 = vmul.f32 %v1606, 0.0078125
        %v1637 = vmul.f32 %v1609, 0.0078125
        %v1638 = vmul.f32 %v1612, 0.0078125
        %v1639 = vmul.f32 %v1615, 0.0078125
        %v1640 = vmul.f32 %v1618, 0.0078125
        %v1641 = vmul.f32 %v1621, 0.0078125
        %v1642 = vmul.f32 %v1624, 0.0078125
        %v1643 = vmul.f32 %v1627, 0.0078125
        %v1644 = vsel %vm1579, %v1501, 0.0
        %1645 = vadd.xlane.f32.xlu0 %v1644
        %v1646 = vpop.xlane.xlu0 %1645
        %v1647 = vsel %vm1579, %v1506, 0.0
        %1648 = vadd.xlane.f32.xlu0 %v1647
        %v1649 = vpop.xlane.xlu0 %1648
        %v1650 = vsel %vm1579, %v1511, 0.0
        %1651 = vadd.xlane.f32.xlu0 %v1650
        %v1652 = vpop.xlane.xlu0 %1651
        %v1653 = vsel %vm1579, %v1516, 0.0
        %1654 = vadd.xlane.f32.xlu0 %v1653
        %v1655 = vpop.xlane.xlu0 %1654
        %v1656 = vsel %vm1579, %v1521, 0.0
        %1657 = vadd.xlane.f32.xlu0 %v1656
        %v1658 = vpop.xlane.xlu0 %1657
        %v1659 = vsel %vm1579, %v1526, 0.0
        %1660 = vadd.xlane.f32.xlu0 %v1659
        %v1661 = vpop.xlane.xlu0 %1660
        %v1662 = vsel %vm1579, %v1531, 0.0
        %1663 = vadd.xlane.f32.xlu0 %v1662
        %v1664 = vpop.xlane.xlu0 %1663
        %v1665 = vsel %vm1579, %v1536, 0.0
        %1666 = vadd.xlane.f32.xlu0 %v1665
        %v1667 = vpop.xlane.xlu0 %1666
        %v1668 = vsel %vm1579, %v1541, 0.0
        %1669 = vadd.xlane.f32.xlu0 %v1668
        %v1670 = vpop.xlane.xlu0 %1669
        %v1671 = vsel %vm1579, %v1546, 0.0
        %1672 = vadd.xlane.f32.xlu0 %v1671
        %v1673 = vpop.xlane.xlu0 %1672
        %v1674 = vsel %vm1579, %v1551, 0.0
        %1675 = vadd.xlane.f32.xlu0 %v1674
        %v1676 = vpop.xlane.xlu0 %1675
        %v1677 = vsel %vm1579, %v1556, 0.0
        %1678 = vadd.xlane.f32.xlu0 %v1677
        %v1679 = vpop.xlane.xlu0 %1678
        %v1680 = vsel %vm1579, %v1561, 0.0
        %1681 = vadd.xlane.f32.xlu0 %v1680
        %v1682 = vpop.xlane.xlu0 %1681
        %v1683 = vsel %vm1579, %v1566, 0.0
        %1684 = vadd.xlane.f32.xlu0 %v1683
        %v1685 = vpop.xlane.xlu0 %1684
        %v1686 = vsel %vm1579, %v1571, 0.0
        %1687 = vadd.xlane.f32.xlu0 %v1686
        %v1688 = vpop.xlane.xlu0 %1687
        %v1689 = vsel %vm1579, %v1576, 0.0
        %1690 = vadd.xlane.f32.xlu0 %v1689
        %v1691 = vpop.xlane.xlu0 %1690
        %v1692 = vmul.f32 %v1646, 0.0078125
        %v1693 = vmul.f32 %v1649, 0.0078125
        %v1694 = vmul.f32 %v1652, 0.0078125
        %v1695 = vmul.f32 %v1655, 0.0078125
        %v1696 = vmul.f32 %v1658, 0.0078125
        %v1697 = vmul.f32 %v1661, 0.0078125
        %v1698 = vmul.f32 %v1664, 0.0078125
        %v1699 = vmul.f32 %v1667, 0.0078125
        %v1700 = vmul.f32 %v1670, 0.0078125
        %v1701 = vmul.f32 %v1673, 0.0078125
        %v1702 = vmul.f32 %v1676, 0.0078125
        %v1703 = vmul.f32 %v1679, 0.0078125
        %v1704 = vmul.f32 %v1682, 0.0078125
        %v1705 = vmul.f32 %v1685, 0.0078125
        %v1706 = vmul.f32 %v1688, 0.0078125
        %v1707 = vmul.f32 %v1691, 0.0078125
        %v1708 = vmul.f32 %v1628, %v1628
        %v1709 = vmul.f32 %v1629, %v1629
        %v1710 = vmul.f32 %v1630, %v1630
        %v1711 = vmul.f32 %v1631, %v1631
        %v1712 = vmul.f32 %v1632, %v1632
        %v1713 = vmul.f32 %v1633, %v1633
        %v1714 = vmul.f32 %v1634, %v1634
        %v1715 = vmul.f32 %v1635, %v1635
        %v1716 = vmul.f32 %v1636, %v1636
        %v1717 = vmul.f32 %v1637, %v1637
        %v1718 = vmul.f32 %v1638, %v1638
        %v1719 = vmul.f32 %v1639, %v1639
        %v1720 = vmul.f32 %v1640, %v1640
        %v1721 = vmul.f32 %v1641, %v1641
        %v1722 = vmul.f32 %v1642, %v1642
        %v1723 = vmul.f32 %v1643, %v1643
        %v1724 = vsub.f32 %v1692, %v1708
        %v1725 = vsub.f32 %v1693, %v1709
        %v1726 = vsub.f32 %v1694, %v1710
        %v1727 = vsub.f32 %v1695, %v1711
        %v1728 = vsub.f32 %v1696, %v1712
        %v1729 = vsub.f32 %v1697, %v1713
        %v1730 = vsub.f32 %v1698, %v1714
        %v1731 = vsub.f32 %v1699, %v1715
        %v1732 = vsub.f32 %v1700, %v1716
        %v1733 = vsub.f32 %v1701, %v1717
        %v1734 = vsub.f32 %v1702, %v1718
        %v1735 = vsub.f32 %v1703, %v1719
        %v1736 = vsub.f32 %v1704, %v1720
        %v1737 = vsub.f32 %v1705, %v1721
        %v1738 = vsub.f32 %v1706, %v1722
        %v1739 = vsub.f32 %v1707, %v1723
        %v1740 = vmax.f32 %v1724, 0.0
        %v1741 = vmax.f32 %v1725, 0.0
        %v1742 = vmax.f32 %v1726, 0.0
        %v1743 = vmax.f32 %v1727, 0.0
        %v1744 = vmax.f32 %v1728, 0.0
        %v1745 = vmax.f32 %v1729, 0.0
        %v1746 = vmax.f32 %v1730, 0.0
        %v1747 = vmax.f32 %v1731, 0.0
        %v1748 = vmax.f32 %v1732, 0.0
        %v1749 = vmax.f32 %v1733, 0.0
        %v1750 = vmax.f32 %v1734, 0.0
        %v1751 = vmax.f32 %v1735, 0.0
        %v1752 = vmax.f32 %v1736, 0.0
        %v1753 = vmax.f32 %v1737, 0.0
        %v1754 = vmax.f32 %v1738, 0.0
        %v1755 = vmax.f32 %v1739, 0.0
        %v1756 = vadd.f32 %v1740, 1e-05
        %v1757 = vadd.f32 %v1741, 1e-05
        %v1758 = vadd.f32 %v1742, 1e-05
        %v1759 = vadd.f32 %v1743, 1e-05
        %v1760 = vadd.f32 %v1744, 1e-05
        %v1761 = vadd.f32 %v1745, 1e-05
        %v1762 = vadd.f32 %v1746, 1e-05
        %v1763 = vadd.f32 %v1747, 1e-05
        %v1764 = vadd.f32 %v1748, 1e-05
        %v1765 = vadd.f32 %v1749, 1e-05
        %v1766 = vadd.f32 %v1750, 1e-05
        %v1767 = vadd.f32 %v1751, 1e-05
        %v1768 = vadd.f32 %v1752, 1e-05
        %v1769 = vadd.f32 %v1753, 1e-05
        %v1770 = vadd.f32 %v1754, 1e-05
        %v1771 = vadd.f32 %v1755, 1e-05
        %v1772 = vrsqrt.pop %v1756
        %v1773 = vrsqrt.pop %v1757
        %v1774 = vrsqrt.pop %v1758
        %v1775 = vrsqrt.pop %v1759
        %v1776 = vrsqrt.pop %v1760
        %v1777 = vrsqrt.pop %v1761
        %v1778 = vrsqrt.pop %v1762
        %v1779 = vrsqrt.pop %v1763
        %v1780 = vrsqrt.pop %v1764
        %v1781 = vrsqrt.pop %v1765
        %v1782 = vrsqrt.pop %v1766
        %v1783 = vrsqrt.pop %v1767
        %v1784 = vrsqrt.pop %v1768
        %v1785 = vrsqrt.pop %v1769
        %v1786 = vrsqrt.pop %v1770
        %v1787 = vrsqrt.pop %v1771
        %v1788 = vsub.f32 %v1113, %v1628
        %v1789 = vsub.f32 %v1114, %v1629
        %v1790 = vsub.f32 %v1115, %v1630
        %v1791 = vsub.f32 %v1116, %v1631
        %v1792 = vsub.f32 %v1117, %v1632
        %v1793 = vsub.f32 %v1118, %v1633
        %v1794 = vsub.f32 %v1119, %v1634
        %v1795 = vsub.f32 %v1120, %v1635
        %v1796 = vsub.f32 %v1121, %v1636
        %v1797 = vsub.f32 %v1122, %v1637
        %v1798 = vsub.f32 %v1123, %v1638
        %v1799 = vsub.f32 %v1124, %v1639
        %v1800 = vsub.f32 %v1125, %v1640
        %v1801 = vsub.f32 %v1126, %v1641
        %v1802 = vsub.f32 %v1127, %v1642
        %v1803 = vsub.f32 %v1128, %v1643
        %v1804 = vmul.f32 %v1788, %v1772
        %v1805 = vmul.f32 %v1789, %v1773
        %v1806 = vmul.f32 %v1790, %v1774
        %v1807 = vmul.f32 %v1791, %v1775
        %v1808 = vmul.f32 %v1792, %v1776
        %v1809 = vmul.f32 %v1793, %v1777
        %v1810 = vmul.f32 %v1794, %v1778
        %v1811 = vmul.f32 %v1795, %v1779
        %v1812 = vmul.f32 %v1796, %v1780
        %v1813 = vmul.f32 %v1797, %v1781
        %v1814 = vmul.f32 %v1798, %v1782
        %v1815 = vmul.f32 %v1799, %v1783
        %v1816 = vmul.f32 %v1800, %v1784
        %v1817 = vmul.f32 %v1801, %v1785
        %v1818 = vmul.f32 %v1802, %v1786
        %v1819 = vmul.f32 %v1803, %v1787
        %v1820 = vld [vmem:[%s11] sm:$0xff]
        %v1821 = vld [vmem:[%s11 + $0x8] sm:$0xff]
        %v1822 = vld [vmem:[%s11 + $0x10] sm:$0xff]
        %v1823 = vld [vmem:[%s11 + $0x18] sm:$0xff]
        %v1824 = vld [vmem:[%s11 + $0x20] sm:$0xff]
        %v1825 = vld [vmem:[%s11 + $0x28] sm:$0xff]
        %v1826 = vld [vmem:[%s11 + $0x30] sm:$0xff]
        %v1827 = vld [vmem:[%s11 + $0x38] sm:$0xff]
        %v1828 = vld [vmem:[%s11 + $0x40] sm:$0xff]
        %v1829 = vld [vmem:[%s11 + $0x48] sm:$0xff]
        %v1830 = vld [vmem:[%s11 + $0x50] sm:$0xff]
        %v1831 = vld [vmem:[%s11 + $0x58] sm:$0xff]
        %v1832 = vld [vmem:[%s11 + $0x60] sm:$0xff]
        %v1833 = vld [vmem:[%s11 + $0x68] sm:$0xff]
        %v1834 = vld [vmem:[%s11 + $0x70] sm:$0xff]
        %v1835 = vld [vmem:[%s11 + $0x78] sm:$0xff]
        %1852 = vrot.lane.b32.xlu0 %v1820, 32
        %v1853 = vpop.permute.xlu0 %1852
        %1854 = vrot.lane.b32.xlu0 %v1821, 32
        %v1855 = vpop.permute.xlu0 %1854
        %1856 = vrot.lane.b32.xlu0 %v1822, 32
        %v1857 = vpop.permute.xlu0 %1856
        %1858 = vrot.lane.b32.xlu0 %v1823, 32
        %v1859 = vpop.permute.xlu0 %1858
        %1860 = vrot.lane.b32.xlu0 %v1824, 32
        %v1861 = vpop.permute.xlu0 %1860
        %1862 = vrot.lane.b32.xlu0 %v1825, 32
        %v1863 = vpop.permute.xlu0 %1862
        %1864 = vrot.lane.b32.xlu0 %v1826, 32
        %v1865 = vpop.permute.xlu0 %1864
        %1866 = vrot.lane.b32.xlu0 %v1827, 32
        %v1867 = vpop.permute.xlu0 %1866
        %1868 = vrot.lane.b32.xlu0 %v1828, 32
        %v1869 = vpop.permute.xlu0 %1868
        %1870 = vrot.lane.b32.xlu0 %v1829, 32
        %v1871 = vpop.permute.xlu0 %1870
        %1872 = vrot.lane.b32.xlu0 %v1830, 32
        %v1873 = vpop.permute.xlu0 %1872
        %1874 = vrot.lane.b32.xlu0 %v1831, 32
        %v1875 = vpop.permute.xlu0 %1874
        %1876 = vrot.lane.b32.xlu0 %v1832, 32
        %v1877 = vpop.permute.xlu0 %1876
        %1878 = vrot.lane.b32.xlu0 %v1833, 32
        %v1879 = vpop.permute.xlu0 %1878
        %1880 = vrot.lane.b32.xlu0 %v1834, 32
        %v1881 = vpop.permute.xlu0 %1880
        %1882 = vrot.lane.b32.xlu0 %v1835, 32
        %v1883 = vpop.permute.xlu0 %1882
        %v1900 = vmul.f32 %v1804, %v1853
        %v1901 = vmul.f32 %v1805, %v1855
        %v1902 = vmul.f32 %v1806, %v1857
        %v1903 = vmul.f32 %v1807, %v1859
        %v1904 = vmul.f32 %v1808, %v1861
        %v1905 = vmul.f32 %v1809, %v1863
        %v1906 = vmul.f32 %v1810, %v1865
        %v1907 = vmul.f32 %v1811, %v1867
        %v1908 = vmul.f32 %v1812, %v1869
        %v1909 = vmul.f32 %v1813, %v1871
        %v1910 = vmul.f32 %v1814, %v1873
        %v1911 = vmul.f32 %v1815, %v1875
        %v1912 = vmul.f32 %v1816, %v1877
        %v1913 = vmul.f32 %v1817, %v1879
        %v1914 = vmul.f32 %v1818, %v1881
        %v1915 = vmul.f32 %v1819, %v1883
        %v1916 = vld [vmem:[%s12] sm:$0xff]
        %v1917 = vld [vmem:[%s12 + $0x8] sm:$0xff]
        %v1918 = vld [vmem:[%s12 + $0x10] sm:$0xff]
        %v1919 = vld [vmem:[%s12 + $0x18] sm:$0xff]
        %v1920 = vld [vmem:[%s12 + $0x20] sm:$0xff]
        %v1921 = vld [vmem:[%s12 + $0x28] sm:$0xff]
        %v1922 = vld [vmem:[%s12 + $0x30] sm:$0xff]
        %v1923 = vld [vmem:[%s12 + $0x38] sm:$0xff]
        %v1924 = vld [vmem:[%s12 + $0x40] sm:$0xff]
        %v1925 = vld [vmem:[%s12 + $0x48] sm:$0xff]
        %v1926 = vld [vmem:[%s12 + $0x50] sm:$0xff]
        %v1927 = vld [vmem:[%s12 + $0x58] sm:$0xff]
        %v1928 = vld [vmem:[%s12 + $0x60] sm:$0xff]
        %v1929 = vld [vmem:[%s12 + $0x68] sm:$0xff]
        %v1930 = vld [vmem:[%s12 + $0x70] sm:$0xff]
        %v1931 = vld [vmem:[%s12 + $0x78] sm:$0xff]
        %1948 = vrot.lane.b32.xlu0 %v1916, 32
        %v1949 = vpop.permute.xlu0 %1948
        %1950 = vrot.lane.b32.xlu0 %v1917, 32
        %v1951 = vpop.permute.xlu0 %1950
        %1952 = vrot.lane.b32.xlu0 %v1918, 32
        %v1953 = vpop.permute.xlu0 %1952
        %1954 = vrot.lane.b32.xlu0 %v1919, 32
        %v1955 = vpop.permute.xlu0 %1954
        %1956 = vrot.lane.b32.xlu0 %v1920, 32
        %v1957 = vpop.permute.xlu0 %1956
        %1958 = vrot.lane.b32.xlu0 %v1921, 32
        %v1959 = vpop.permute.xlu0 %1958
        %1960 = vrot.lane.b32.xlu0 %v1922, 32
        %v1961 = vpop.permute.xlu0 %1960
        %1962 = vrot.lane.b32.xlu0 %v1923, 32
        %v1963 = vpop.permute.xlu0 %1962
        %1964 = vrot.lane.b32.xlu0 %v1924, 32
        %v1965 = vpop.permute.xlu0 %1964
        %1966 = vrot.lane.b32.xlu0 %v1925, 32
        %v1967 = vpop.permute.xlu0 %1966
        %1968 = vrot.lane.b32.xlu0 %v1926, 32
        %v1969 = vpop.permute.xlu0 %1968
        %1970 = vrot.lane.b32.xlu0 %v1927, 32
        %v1971 = vpop.permute.xlu0 %1970
        %1972 = vrot.lane.b32.xlu0 %v1928, 32
        %v1973 = vpop.permute.xlu0 %1972
        %1974 = vrot.lane.b32.xlu0 %v1929, 32
        %v1975 = vpop.permute.xlu0 %1974
        %1976 = vrot.lane.b32.xlu0 %v1930, 32
        %v1977 = vpop.permute.xlu0 %1976
        %1978 = vrot.lane.b32.xlu0 %v1931, 32
        %v1979 = vpop.permute.xlu0 %1978
        %v1996 = vadd.f32 %v1900, %v1949
        %v1997 = vadd.f32 %v1901, %v1951
        %v1998 = vadd.f32 %v1902, %v1953
        %v1999 = vadd.f32 %v1903, %v1955
        %v2000 = vadd.f32 %v1904, %v1957
        %v2001 = vadd.f32 %v1905, %v1959
        %v2002 = vadd.f32 %v1906, %v1961
        %v2003 = vadd.f32 %v1907, %v1963
        %v2004 = vadd.f32 %v1908, %v1965
        %v2005 = vadd.f32 %v1909, %v1967
        %v2006 = vadd.f32 %v1910, %v1969
        %v2007 = vadd.f32 %v1911, %v1971
        %v2008 = vadd.f32 %v1912, %v1973
        %v2009 = vadd.f32 %v1913, %v1975
        %v2010 = vadd.f32 %v1914, %v1977
        %v2011 = vadd.f32 %v1915, %v1979
        %2028 = vrot.lane.b32.xlu0 %v1996, 96
        %v2029 = vpop.permute.xlu0 %2028
        %2030 = vrot.lane.b32.xlu0 %v1997, 96
        %v2031 = vpop.permute.xlu0 %2030
        %2032 = vrot.lane.b32.xlu0 %v1998, 96
        %v2033 = vpop.permute.xlu0 %2032
        %2034 = vrot.lane.b32.xlu0 %v1999, 96
        %v2035 = vpop.permute.xlu0 %2034
        %2036 = vrot.lane.b32.xlu0 %v2000, 96
        %v2037 = vpop.permute.xlu0 %2036
        %2038 = vrot.lane.b32.xlu0 %v2001, 96
        %v2039 = vpop.permute.xlu0 %2038
        %2040 = vrot.lane.b32.xlu0 %v2002, 96
        %v2041 = vpop.permute.xlu0 %2040
        %2042 = vrot.lane.b32.xlu0 %v2003, 96
        %v2043 = vpop.permute.xlu0 %2042
        %2044 = vrot.lane.b32.xlu0 %v2004, 96
        %v2045 = vpop.permute.xlu0 %2044
        %2046 = vrot.lane.b32.xlu0 %v2005, 96
        %v2047 = vpop.permute.xlu0 %2046
        %2048 = vrot.lane.b32.xlu0 %v2006, 96
        %v2049 = vpop.permute.xlu0 %2048
        %2050 = vrot.lane.b32.xlu0 %v2007, 96
        %v2051 = vpop.permute.xlu0 %2050
        %2052 = vrot.lane.b32.xlu0 %v2008, 96
        %v2053 = vpop.permute.xlu0 %2052
        %2054 = vrot.lane.b32.xlu0 %v2009, 96
        %v2055 = vpop.permute.xlu0 %2054
        %2056 = vrot.lane.b32.xlu0 %v2010, 96
        %v2057 = vpop.permute.xlu0 %2056
        %2058 = vrot.lane.b32.xlu0 %v2011, 96
        %v2059 = vpop.permute.xlu0 %2058
        %2076 = vst.msk [vmem:[%s450] sm:$0xff] %vm1579, %v2029
        %2077 = vst.msk [vmem:[%s450 + $0x8] sm:$0xff] %vm1579, %v2031
        %2078 = vst.msk [vmem:[%s450 + $0x10] sm:$0xff] %vm1579, %v2033
        %2079 = vst.msk [vmem:[%s450 + $0x18] sm:$0xff] %vm1579, %v2035
        %2080 = vst.msk [vmem:[%s450 + $0x20] sm:$0xff] %vm1579, %v2037
        %2081 = vst.msk [vmem:[%s450 + $0x28] sm:$0xff] %vm1579, %v2039
        %2082 = vst.msk [vmem:[%s450 + $0x30] sm:$0xff] %vm1579, %v2041
        %2083 = vst.msk [vmem:[%s450 + $0x38] sm:$0xff] %vm1579, %v2043
        %2084 = vst.msk [vmem:[%s450 + $0x40] sm:$0xff] %vm1579, %v2045
        %2085 = vst.msk [vmem:[%s450 + $0x48] sm:$0xff] %vm1579, %v2047
        %2086 = vst.msk [vmem:[%s450 + $0x50] sm:$0xff] %vm1579, %v2049
        %2087 = vst.msk [vmem:[%s450 + $0x58] sm:$0xff] %vm1579, %v2051
        %2088 = vst.msk [vmem:[%s450 + $0x60] sm:$0xff] %vm1579, %v2053
        %2089 = vst.msk [vmem:[%s450 + $0x68] sm:$0xff] %vm1579, %v2055
        %2090 = vst.msk [vmem:[%s450 + $0x70] sm:$0xff] %vm1579, %v2057
        %2091 = vst.msk [vmem:[%s450 + $0x78] sm:$0xff] %vm1579, %v2059
        %s2092 = smul.u32 16, %s25
        %p2093 = scmp.lt.s32.totalorder %s2092, 31
        %s2094 = scalar_select %p2093, %s2092, 31
        %s2095 = smul.addr %s2094, 8
        %s2096 = scalar_lea.vmem %s13, %s2095
        // Predicated region
        $region77: #{tpu_custom_call.1} parent=71 // pred_check
          %p2097 = pneg %p321
        $region78: #{tpu_custom_call.1} parent=71 // pred_check_branch
          %2099 = sbr.rel (%p2097) target = $region80
        $region79: #{tpu_custom_call.1} parent=71 // pred_region
          %s2100 = smul.u32 16, %s25
        $region80: #{tpu_custom_call.1} parent=71 // pred_fallthru
          _
      $region72: #{tpu_custom_call.1} parent=5 // pred_fallthru
        _
      %p2101 = scmp.le.s32.totalorder 2, %s20
      // Predicated region
      $region81: #{tpu_custom_call.1} parent=5 // pred_check
        %p2102 = pneg %p2101
      $region82: #{tpu_custom_call.1} parent=5 // pred_check_branch
        %2104 = sbr.rel (%p2102) target = $region84
      $region83: #{tpu_custom_call.1} parent=5 // pred_region
        %s2105 = ssub.s32 %s20, 2
        // Predicated region
        $region85: #{tpu_custom_call.1} parent=83 // pred_check
          %p2106 = pneg %p327
        $region86: #{tpu_custom_call.1} parent=83 // pred_check_branch
          %2108 = sbr.rel (%p2106) target = $region88
        $region87: #{tpu_custom_call.1} parent=83 // pred_region
          %s2109 = smul.u32 16, %s26
          %p2110 = scmp.lt.s32.totalorder %s2109, 31
          %s2111 = scalar_select %p2110, %s2109, 31
          %s2112 = smul.addr %s2111, 8
          %s2113 = scalar_lea.vmem %s13, %s2112
        $region88: #{tpu_custom_call.1} parent=83 // pred_fallthru
          _
      $region84: #{tpu_custom_call.1} parent=5 // pred_fallthru
        _
    $region6: #{tpu_custom_call.1} parent=1 // loop_footer
      %s24 = sadd.s32 1, %s20
    $region7: #{tpu_custom_call.1} parent=1 // loop_footer_branch
      %19 = sbr.rel target = $region3
    $region8: #{tpu_custom_call.1} parent=1 // loop_exit
      _
    %2114 = vsyncpa [#allocation3], 1
    %s2115 = scalar_lea.sflag [#allocation3], 1
    %2116 = vsyncpa %s2115, 1

</llo_original>
